<compile_context>
chip_gen: v5e
topology: v5e:2x2
jax: 0.10.0
libtpu: 0.0.40
codegen_flags: <defaults>
</compile_context>

<pallas_src>
import functools
import math

import jax
import jax.numpy as jnp
from jax import lax
from jax.experimental import pallas as pl
from jax.experimental.pallas import tpu as pltpu

# ---- model hyper-parameters --------------------------------------------------
HIDDEN_DIM = 32
NUM_HEADS = 4
HEAD_DIM = HIDDEN_DIM // NUM_HEADS
FF_DIM = 4 * HIDDEN_DIM
LN_EPS = 1e-5          # PyTorch nn.LayerNorm default
DROPOUT_P = 0.1        # unused at inference; dropout == identity


def _choose_batch_tile(B, Sq, Skv):
    """Pick TB | B. Prefer a single grid step; only split the batch when each
    tile still carries >= 256 query rows (v7x megacore) and the tile fits VMEM."""
    H, FF = HIDDEN_DIM, FF_DIM
    # Conservative f32 VMEM footprint per batch element inside one grid step:
    # double-buffered input blocks + q/k|v + scores + FFN hidden + temporaries.
    bytes_per_b = 4 * (
        2 * (Sq + Skv) * H        # double-buffered x / f input blocks
        + (Sq + 2 * Skv) * H      # q, k|v projections
        + 2 * Sq * Skv            # scores / probs (per-head, with slack)
        + Sq * FF                 # FFN hidden
        + 4 * Sq * H              # attn_out / residual / LN / output temporaries
    )
    vmem_budget = 24 << 20        # headroom under the 32 MiB scoped default (v7x: 64 MiB physical)
    max_tb = max(1, vmem_budget // max(bytes_per_b, 1))
    divisors = [d for d in range(1, B + 1) if B % d == 0 and d <= max_tb] or [1]
    # Keep >=2 grid tiles only when each tile still has meaningful work.
    multi = [d for d in divisors if B // d >= 2 and d * Sq >= 256]
    return max(multi) if multi else max(divisors)


def _transformer_block_kernel(
    x_ref, f_ref,
    wq_ref, bq_ref, wkv_ref, bkv_ref, wo_ref, bo_ref,
    g1_ref, be1_ref, w1_ref, b1_ref, w2_ref, b2_ref, g2_ref, be2_ref,
    out_ref, *, tb, sq, skv, dense_store,
):
    H = HIDDEN_DIM
    x = x_ref[0].astype(jnp.float32)     # (tb*sq,  H)  query stream (flattened rows)
    f = f_ref[0].astype(jnp.float32)     # (tb*skv, H)  key/value stream

    # --- projections (row-batched 2D matmuls; K|V fused; scale folded into W_q)
    q = jnp.dot(x, wq_ref[...], preferred_element_type=jnp.float32) + bq_ref[...]
    kv = jnp.dot(f, wkv_ref[...], preferred_element_type=jnp.float32) + bkv_ref[...]
    k = kv[:, :H]
    v = kv[:, H:]

    # split rows back into (batch, seq); last dim untouched
    q3 = q.reshape(tb, sq, H)
    k3 = k.reshape(tb, skv, H)
    v3 = v.reshape(tb, skv, H)

    # --- attention: per-head batched einsums (supported 3D dot_general pattern),
    #     single concat, then ONE K=32 pass through W_o (no serial accumulation).
    head_outs = []
    for h in range(NUM_HEADS):           # static 4-way unroll
        lo, hi = h * HEAD_DIM, (h + 1) * HEAD_DIM
        qh = q3[:, :, lo:hi]             # (tb, sq,  hd)
        kh = k3[:, :, lo:hi]             # (tb, skv, hd)
        vh = v3[:, :, lo:hi]             # (tb, skv, hd)
        s = jnp.einsum("bqd,bkd->bqk", qh, kh,
                       preferred_element_type=jnp.float32)       # scale pre-folded
        s = s - jnp.max(s, axis=-1, keepdims=True)
        p = jnp.exp(s)
        p = p / jnp.sum(p, axis=-1, keepdims=True)               # exact softmax
        head_outs.append(jnp.einsum("bqk,bkd->bqd", p, vh,
                                    preferred_element_type=jnp.float32))
    attn = jnp.concatenate(head_outs, axis=-1).reshape(tb * sq, H)
    attn_out = jnp.dot(attn, wo_ref[...],
                       preferred_element_type=jnp.float32) + bo_ref[...]

    # --- residual + LayerNorm 1 (dropout == identity) -------------------------
    h1 = x + attn_out
    mu1 = jnp.mean(h1, axis=-1, keepdims=True)
    var1 = jnp.mean((h1 - mu1) ** 2, axis=-1, keepdims=True)
    h1n = (h1 - mu1) * lax.rsqrt(var1 + LN_EPS) * g1_ref[...] + be1_ref[...]

    # --- feed-forward ----------------------------------------------------------
    ff = jnp.dot(h1n, w1_ref[...], preferred_element_type=jnp.float32) + b1_ref[...]
    ff = jnp.maximum(ff, 0.0)
    ff = jnp.dot(ff, w2_ref[...], preferred_element_type=jnp.float32) + b2_ref[...]

    # --- residual + LayerNorm 2 ------------------------------------------------
    h2 = h1n + ff
    mu2 = jnp.mean(h2, axis=-1, keepdims=True)
    var2 = jnp.mean((h2 - mu2) ** 2, axis=-1, keepdims=True)
    out = (h2 - mu2) * lax.rsqrt(var2 + LN_EPS) * g2_ref[...] + be2_ref[...]

    # --- store ------------------------------------------------------------------
    if dense_store:
        # lane-dense (TB, Sq*H) store — pays off once TB >= 8 fills sublanes too
        out_ref[0] = out.reshape(tb, sq * H).astype(out_ref.dtype)
    else:
        # TB < 8: store rows directly, no relayout
        out_ref[0] = out.astype(out_ref.dtype)


def prepare_params(params):
    """One-time parameter transform: pre-transposed weights -> kernel weights.
    Folds the attention scale into W_q/b_q and fuses W_k|W_v into one matmul."""
    (wq, bq, wk, bk, wv, bv, wo, bo,
     g1, be1, w1, b1, w2, b2, g2, be2) = params
    inv_scale = 1.0 / math.sqrt(HEAD_DIM)
    wq_s = wq * inv_scale
    bq_s = bq * inv_scale
    wkv = jnp.concatenate([wk, wv], axis=1)    # (H, 2H)
    bkv = jnp.concatenate([bk, bv], axis=1)    # (1, 2H)
    return (wq_s, bq_s, wkv, bkv, wo, bo, g1, be1, w1, b1, w2, b2, g2, be2)


def transformer_block(stock, future, weights):
    """stock: (B, Sq, H), future: (B, Skv, H), weights from prepare_params().
    Returns (B, Sq, H)."""
    B, Sq, H = stock.shape
    _, Skv, _ = future.shape

    TB = _choose_batch_tile(B, Sq, Skv)
    G = B // TB
    dense_store = TB >= 8

    # fold batch tiles so each block's last two dims equal the full array dims
    stock_t = stock.reshape(G, TB * Sq, H)
    future_t = future.reshape(G, TB * Skv, H)

    def full_spec(p):
        return pl.BlockSpec(p.shape, lambda g, _nd=p.ndim: (0,) * _nd)

    in_specs = [
        pl.BlockSpec((1, TB * Sq, H), lambda g: (g, 0, 0)),
        pl.BlockSpec((1, TB * Skv, H), lambda g: (g, 0, 0)),
    ] + [full_spec(p) for p in weights]

    if dense_store:
        out_shape = jax.ShapeDtypeStruct((G, TB, Sq * H), jnp.float32)
        out_specs = pl.BlockSpec((1, TB, Sq * H), lambda g: (g, 0, 0))
    else:
        out_shape = jax.ShapeDtypeStruct((G, TB * Sq, H), jnp.float32)
        out_specs = pl.BlockSpec((1, TB * Sq, H), lambda g: (g, 0, 0))

    kernel = functools.partial(
        _transformer_block_kernel, tb=TB, sq=Sq, skv=Skv, dense_store=dense_store)

    out = pl.pallas_call(
        kernel,
        out_shape=out_shape,
        grid=(G,),
        in_specs=in_specs,
        out_specs=out_specs,
        compiler_params=pltpu.CompilerParams(
            dimension_semantics=("parallel",)),
    )(stock_t, future_t, *weights)

    # both output layouts are row-major identical to (B, Sq, H)
    return out.reshape(B, Sq, H)


# ---------------- pure-JAX reference (for correctness check) -----------------
def reference(stock, future, params):
    (wq, bq, wk, bk, wv, bv, wo, bo,
     g1, be1, w1, b1, w2, b2, g2, be2) = params
    B, Sq, H = stock.shape
    Skv = future.shape[1]

    q = stock @ wq + bq
    k = future @ wk + bk
    v = future @ wv + bv

    def split(t, S):
        return t.reshape(B, S, NUM_HEADS, HEAD_DIM).transpose(0, 2, 1, 3)

    qh, kh, vh = split(q, Sq), split(k, Skv), split(v, Skv)
    scores = jnp.einsum("bhqd,bhkd->bhqk", qh, kh) / math.sqrt(HEAD_DIM)
    p = jax.nn.softmax(scores, axis=-1)
    attn = jnp.einsum("bhqk,bhkd->bhqd", p, vh)
    attn = attn.transpose(0, 2, 1, 3).reshape(B, Sq, H)
    attn_out = attn @ wo + bo

    def ln(x, g, b):
        mu = jnp.mean(x, axis=-1, keepdims=True)
        var = jnp.mean((x - mu) ** 2, axis=-1, keepdims=True)
        return (x - mu) / jnp.sqrt(var + LN_EPS) * g + b

    h1 = ln(stock + attn_out, g1, be1)
    ff = jnp.maximum(h1 @ w1 + b1, 0.0) @ w2 + b2
    return ln(h1 + ff, g2, be2)


def init_params(key):
    H, F = HIDDEN_DIM, FF_DIM
    ks = jax.random.split(key, 8)
    s = 0.1
    wq = jax.random.normal(ks[0], (H, H), jnp.float32) * s
    wk = jax.random.normal(ks[1], (H, H), jnp.float32) * s
    wv = jax.random.normal(ks[2], (H, H), jnp.float32) * s
    wo = jax.random.normal(ks[3], (H, H), jnp.float32) * s
    w1 = jax.random.normal(ks[4], (H, F), jnp.float32) * s
    w2 = jax.random.normal(ks[5], (F, H), jnp.float32) * s
    bq = jax.random.normal(ks[6], (1, H), jnp.float32) * s
    bk = jnp.zeros((1, H), jnp.float32)
    bv = jax.random.normal(ks[7], (1, H), jnp.float32) * s
    bo = jnp.zeros((1, H), jnp.float32)
    b1 = jnp.full((1, F), 0.01, jnp.float32)
    b2 = jnp.full((1, H), -0.01, jnp.float32)
    g1 = jnp.ones((1, H), jnp.float32)
    be1 = jnp.zeros((1, H), jnp.float32)
    g2 = jnp.ones((1, H), jnp.float32)
    be2 = jnp.zeros((1, H), jnp.float32)
    return (wq, bq, wk, bk, wv, bv, wo, bo,
            g1, be1, w1, b1, w2, b2, g2, be2)


if __name__ == "__main__":
    key = jax.random.PRNGKey(0)
    k_p, k_s, k_f = jax.random.split(key, 3)

    B, Sq, Skv = 2, 8, 8
    stock = jax.random.normal(k_s, (B, Sq, HIDDEN_DIM), jnp.float32)
    future = jax.random.normal(k_f, (B, Skv, HIDDEN_DIM), jnp.float32)
    params = init_params(k_p)

    kernel_weights = prepare_params(params)   # one-time parameter transform
    out = jax.block_until_ready(transformer_block(stock, future, kernel_weights))
    ref = reference(stock, future, params)

    assert out.shape == (B, Sq, HIDDEN_DIM)
    assert jnp.allclose(out, ref, atol=1e-4, rtol=1e-4), "mismatch vs reference"

    print("KERNEL_OK")
</pallas_src>

<mosaic_0001>
module attributes {stable_mosaic.version = 11 : i64} {
  func.func @_transformer_block_kernel(%arg0: i32, %arg1: memref<1x16x32xf32, #tpu.memory_space<vmem>>, %arg2: memref<1x16x32xf32, #tpu.memory_space<vmem>>, %arg3: memref<32x32xf32, #tpu.memory_space<vmem>>, %arg4: memref<1x32xf32, #tpu.memory_space<vmem>>, %arg5: memref<32x64xf32, #tpu.memory_space<vmem>>, %arg6: memref<1x64xf32, #tpu.memory_space<vmem>>, %arg7: memref<32x32xf32, #tpu.memory_space<vmem>>, %arg8: memref<1x32xf32, #tpu.memory_space<vmem>>, %arg9: memref<1x32xf32, #tpu.memory_space<vmem>>, %arg10: memref<1x32xf32, #tpu.memory_space<vmem>>, %arg11: memref<32x128xf32, #tpu.memory_space<vmem>>, %arg12: memref<1x128xf32, #tpu.memory_space<vmem>>, %arg13: memref<128x32xf32, #tpu.memory_space<vmem>>, %arg14: memref<1x32xf32, #tpu.memory_space<vmem>>, %arg15: memref<1x32xf32, #tpu.memory_space<vmem>>, %arg16: memref<1x32xf32, #tpu.memory_space<vmem>>, %arg17: memref<1x16x32xf32, #tpu.memory_space<vmem>>) attributes {dimension_semantics = [#tpu.dimension_semantics<parallel>], iteration_bounds = array<i64: 1>, scalar_prefetch = 0 : i64, scratch_operands = 0 : i64, tpu.core_type = #tpu.core_type<tc>, window_params = [{transform_indices = @transform_0, window_bounds = array<i64: 1, 16, 32>}, {transform_indices = @transform_1, window_bounds = array<i64: 1, 16, 32>}, {pipeline_mode = #tpu.pipeline_mode<synchronous>, transform_indices = @transform_2, window_bounds = array<i64: 32, 32>}, {pipeline_mode = #tpu.pipeline_mode<synchronous>, transform_indices = @transform_3, window_bounds = array<i64: 1, 32>}, {pipeline_mode = #tpu.pipeline_mode<synchronous>, transform_indices = @transform_4, window_bounds = array<i64: 32, 64>}, {pipeline_mode = #tpu.pipeline_mode<synchronous>, transform_indices = @transform_5, window_bounds = array<i64: 1, 64>}, {pipeline_mode = #tpu.pipeline_mode<synchronous>, transform_indices = @transform_6, window_bounds = array<i64: 32, 32>}, {pipeline_mode = #tpu.pipeline_mode<synchronous>, transform_indices = @transform_7, window_bounds = array<i64: 1, 32>}, {pipeline_mode = #tpu.pipeline_mode<synchronous>, transform_indices = @transform_8, window_bounds = array<i64: 1, 32>}, {pipeline_mode = #tpu.pipeline_mode<synchronous>, transform_indices = @transform_9, window_bounds = array<i64: 1, 32>}, {pipeline_mode = #tpu.pipeline_mode<synchronous>, transform_indices = @transform_10, window_bounds = array<i64: 32, 128>}, {pipeline_mode = #tpu.pipeline_mode<synchronous>, transform_indices = @transform_11, window_bounds = array<i64: 1, 128>}, {pipeline_mode = #tpu.pipeline_mode<synchronous>, transform_indices = @transform_12, window_bounds = array<i64: 128, 32>}, {pipeline_mode = #tpu.pipeline_mode<synchronous>, transform_indices = @transform_13, window_bounds = array<i64: 1, 32>}, {pipeline_mode = #tpu.pipeline_mode<synchronous>, transform_indices = @transform_14, window_bounds = array<i64: 1, 32>}, {pipeline_mode = #tpu.pipeline_mode<synchronous>, transform_indices = @transform_15, window_bounds = array<i64: 1, 32>}, {transform_indices = @transform_16, window_bounds = array<i64: 1, 16, 32>}]} {
    %c0 = arith.constant 0 : index
    %c0_0 = arith.constant 0 : index
    %c0_1 = arith.constant 0 : index
    %0 = vector.load %arg1[%c0, %c0_0, %c0_1] : memref<1x16x32xf32, #tpu.memory_space<vmem>>, vector<1x16x32xf32>
    %1 = vector.shape_cast %0 : vector<1x16x32xf32> to vector<16x32xf32>
    %c0_2 = arith.constant 0 : index
    %c0_3 = arith.constant 0 : index
    %c0_4 = arith.constant 0 : index
    %2 = vector.load %arg2[%c0_2, %c0_3, %c0_4] : memref<1x16x32xf32, #tpu.memory_space<vmem>>, vector<1x16x32xf32>
    %3 = vector.shape_cast %2 : vector<1x16x32xf32> to vector<16x32xf32>
    %c0_5 = arith.constant 0 : index
    %c0_6 = arith.constant 0 : index
    %4 = vector.load %arg3[%c0_5, %c0_6] : memref<32x32xf32, #tpu.memory_space<vmem>>, vector<32x32xf32>
    %cst = arith.constant dense<0.000000e+00> : vector<16x32xf32>
    %5 = tpu.matmul %1, %4, %cst {dimension_numbers = #tpu.dot_dimension_numbers<[1], [0], [0], [1], [0, 0, 1, 1], [], []>} : vector<16x32xf32>, vector<32x32xf32>, vector<16x32xf32> -> vector<16x32xf32>
    %c0_7 = arith.constant 0 : index
    %c0_8 = arith.constant 0 : index
    %6 = vector.load %arg4[%c0_7, %c0_8] : memref<1x32xf32, #tpu.memory_space<vmem>>, vector<1x32xf32>
    %7 = vector.broadcast %6 : vector<1x32xf32> to vector<16x32xf32>
    %8 = arith.addf %5, %7 : vector<16x32xf32>
    %c0_9 = arith.constant 0 : index
    %c0_10 = arith.constant 0 : index
    %9 = vector.load %arg5[%c0_9, %c0_10] : memref<32x64xf32, #tpu.memory_space<vmem>>, vector<32x64xf32>
    %cst_11 = arith.constant dense<0.000000e+00> : vector<16x64xf32>
    %10 = tpu.matmul %3, %9, %cst_11 {dimension_numbers = #tpu.dot_dimension_numbers<[1], [0], [0], [1], [0, 0, 1, 1], [], []>} : vector<16x32xf32>, vector<32x64xf32>, vector<16x64xf32> -> vector<16x64xf32>
    %c0_12 = arith.constant 0 : index
    %c0_13 = arith.constant 0 : index
    %11 = vector.load %arg6[%c0_12, %c0_13] : memref<1x64xf32, #tpu.memory_space<vmem>>, vector<1x64xf32>
    %12 = vector.broadcast %11 : vector<1x64xf32> to vector<16x64xf32>
    %13 = arith.addf %10, %12 : vector<16x64xf32>
    %14 = vector.extract_strided_slice %13 {offsets = [0, 0], sizes = [16, 32], strides = [1, 1]} : vector<16x64xf32> to vector<16x32xf32>
    %15 = vector.extract_strided_slice %13 {offsets = [0, 32], sizes = [16, 32], strides = [1, 1]} : vector<16x64xf32> to vector<16x32xf32>
    %16 = vector.shape_cast %8 : vector<16x32xf32> to vector<2x8x32xf32>
    %17 = vector.shape_cast %14 : vector<16x32xf32> to vector<2x8x32xf32>
    %18 = vector.shape_cast %15 : vector<16x32xf32> to vector<2x8x32xf32>
    %19 = vector.extract_strided_slice %16 {offsets = [0, 0, 0], sizes = [2, 8, 8], strides = [1, 1, 1]} : vector<2x8x32xf32> to vector<2x8x8xf32>
    %20 = vector.extract_strided_slice %17 {offsets = [0, 0, 0], sizes = [2, 8, 8], strides = [1, 1, 1]} : vector<2x8x32xf32> to vector<2x8x8xf32>
    %21 = vector.extract_strided_slice %18 {offsets = [0, 0, 0], sizes = [2, 8, 8], strides = [1, 1, 1]} : vector<2x8x32xf32> to vector<2x8x8xf32>
    "tpu.trace_start"() <{level = 10 : i32, message = "bqd,bkd->bqk"}> : () -> ()
    %cst_14 = arith.constant dense<0.000000e+00> : vector<2x8x8xf32>
    %22 = tpu.matmul %19, %20, %cst_14 {dimension_numbers = #tpu.dot_dimension_numbers<[2], [2], [1], [1], [0, 0, 0, 1, 1, 1], [0], [0]>} : vector<2x8x8xf32>, vector<2x8x8xf32>, vector<2x8x8xf32> -> vector<2x8x8xf32>
    "tpu.trace_stop"() : () -> ()
    %cst_15 = arith.constant dense<0xFF800000> : vector<2x8xf32>
    %23 = vector.multi_reduction <maximumf>, %22, %cst_15 [2] : vector<2x8x8xf32> to vector<2x8xf32>
    %24 = vector.shape_cast %23 : vector<2x8xf32> to vector<2x8x1xf32>
    %25 = vector.broadcast %24 : vector<2x8x1xf32> to vector<2x8x8xf32>
    %26 = arith.subf %22, %25 : vector<2x8x8xf32>
    %27 = math.exp %26 : vector<2x8x8xf32>
    %cst_16 = arith.constant dense<0.000000e+00> : vector<2x8xf32>
    %28 = vector.multi_reduction <add>, %27, %cst_16 [2] : vector<2x8x8xf32> to vector<2x8xf32>
    %29 = vector.shape_cast %28 : vector<2x8xf32> to vector<2x8x1xf32>
    %30 = vector.broadcast %29 : vector<2x8x1xf32> to vector<2x8x8xf32>
    %31 = arith.divf %27, %30 : vector<2x8x8xf32>
    "tpu.trace_start"() <{level = 10 : i32, message = "bqk,bkd->bqd"}> : () -> ()
    %cst_17 = arith.constant dense<0.000000e+00> : vector<2x8x8xf32>
    %32 = tpu.matmul %31, %21, %cst_17 {dimension_numbers = #tpu.dot_dimension_numbers<[2], [1], [1], [2], [0, 0, 0, 1, 1, 2], [0], [0]>} : vector<2x8x8xf32>, vector<2x8x8xf32>, vector<2x8x8xf32> -> vector<2x8x8xf32>
    "tpu.trace_stop"() : () -> ()
    %33 = vector.extract_strided_slice %16 {offsets = [0, 0, 8], sizes = [2, 8, 8], strides = [1, 1, 1]} : vector<2x8x32xf32> to vector<2x8x8xf32>
    %34 = vector.extract_strided_slice %17 {offsets = [0, 0, 8], sizes = [2, 8, 8], strides = [1, 1, 1]} : vector<2x8x32xf32> to vector<2x8x8xf32>
    %35 = vector.extract_strided_slice %18 {offsets = [0, 0, 8], sizes = [2, 8, 8], strides = [1, 1, 1]} : vector<2x8x32xf32> to vector<2x8x8xf32>
    "tpu.trace_start"() <{level = 10 : i32, message = "bqd,bkd->bqk"}> : () -> ()
    %cst_18 = arith.constant dense<0.000000e+00> : vector<2x8x8xf32>
    %36 = tpu.matmul %33, %34, %cst_18 {dimension_numbers = #tpu.dot_dimension_numbers<[2], [2], [1], [1], [0, 0, 0, 1, 1, 1], [0], [0]>} : vector<2x8x8xf32>, vector<2x8x8xf32>, vector<2x8x8xf32> -> vector<2x8x8xf32>
    "tpu.trace_stop"() : () -> ()
    %cst_19 = arith.constant dense<0xFF800000> : vector<2x8xf32>
    %37 = vector.multi_reduction <maximumf>, %36, %cst_19 [2] : vector<2x8x8xf32> to vector<2x8xf32>
    %38 = vector.shape_cast %37 : vector<2x8xf32> to vector<2x8x1xf32>
    %39 = vector.broadcast %38 : vector<2x8x1xf32> to vector<2x8x8xf32>
    %40 = arith.subf %36, %39 : vector<2x8x8xf32>
    %41 = math.exp %40 : vector<2x8x8xf32>
    %cst_20 = arith.constant dense<0.000000e+00> : vector<2x8xf32>
    %42 = vector.multi_reduction <add>, %41, %cst_20 [2] : vector<2x8x8xf32> to vector<2x8xf32>
    %43 = vector.shape_cast %42 : vector<2x8xf32> to vector<2x8x1xf32>
    %44 = vector.broadcast %43 : vector<2x8x1xf32> to vector<2x8x8xf32>
    %45 = arith.divf %41, %44 : vector<2x8x8xf32>
    "tpu.trace_start"() <{level = 10 : i32, message = "bqk,bkd->bqd"}> : () -> ()
    %cst_21 = arith.constant dense<0.000000e+00> : vector<2x8x8xf32>
    %46 = tpu.matmul %45, %35, %cst_21 {dimension_numbers = #tpu.dot_dimension_numbers<[2], [1], [1], [2], [0, 0, 0, 1, 1, 2], [0], [0]>} : vector<2x8x8xf32>, vector<2x8x8xf32>, vector<2x8x8xf32> -> vector<2x8x8xf32>
    "tpu.trace_stop"() : () -> ()
    %47 = vector.extract_strided_slice %16 {offsets = [0, 0, 16], sizes = [2, 8, 8], strides = [1, 1, 1]} : vector<2x8x32xf32> to vector<2x8x8xf32>
    %48 = vector.extract_strided_slice %17 {offsets = [0, 0, 16], sizes = [2, 8, 8], strides = [1, 1, 1]} : vector<2x8x32xf32> to vector<2x8x8xf32>
    %49 = vector.extract_strided_slice %18 {offsets = [0, 0, 16], sizes = [2, 8, 8], strides = [1, 1, 1]} : vector<2x8x32xf32> to vector<2x8x8xf32>
    "tpu.trace_start"() <{level = 10 : i32, message = "bqd,bkd->bqk"}> : () -> ()
    %cst_22 = arith.constant dense<0.000000e+00> : vector<2x8x8xf32>
    %50 = tpu.matmul %47, %48, %cst_22 {dimension_numbers = #tpu.dot_dimension_numbers<[2], [2], [1], [1], [0, 0, 0, 1, 1, 1], [0], [0]>} : vector<2x8x8xf32>, vector<2x8x8xf32>, vector<2x8x8xf32> -> vector<2x8x8xf32>
    "tpu.trace_stop"() : () -> ()
    %cst_23 = arith.constant dense<0xFF800000> : vector<2x8xf32>
    %51 = vector.multi_reduction <maximumf>, %50, %cst_23 [2] : vector<2x8x8xf32> to vector<2x8xf32>
    %52 = vector.shape_cast %51 : vector<2x8xf32> to vector<2x8x1xf32>
    %53 = vector.broadcast %52 : vector<2x8x1xf32> to vector<2x8x8xf32>
    %54 = arith.subf %50, %53 : vector<2x8x8xf32>
    %55 = math.exp %54 : vector<2x8x8xf32>
    %cst_24 = arith.constant dense<0.000000e+00> : vector<2x8xf32>
    %56 = vector.multi_reduction <add>, %55, %cst_24 [2] : vector<2x8x8xf32> to vector<2x8xf32>
    %57 = vector.shape_cast %56 : vector<2x8xf32> to vector<2x8x1xf32>
    %58 = vector.broadcast %57 : vector<2x8x1xf32> to vector<2x8x8xf32>
    %59 = arith.divf %55, %58 : vector<2x8x8xf32>
    "tpu.trace_start"() <{level = 10 : i32, message = "bqk,bkd->bqd"}> : () -> ()
    %cst_25 = arith.constant dense<0.000000e+00> : vector<2x8x8xf32>
    %60 = tpu.matmul %59, %49, %cst_25 {dimension_numbers = #tpu.dot_dimension_numbers<[2], [1], [1], [2], [0, 0, 0, 1, 1, 2], [0], [0]>} : vector<2x8x8xf32>, vector<2x8x8xf32>, vector<2x8x8xf32> -> vector<2x8x8xf32>
    "tpu.trace_stop"() : () -> ()
    %61 = vector.extract_strided_slice %16 {offsets = [0, 0, 24], sizes = [2, 8, 8], strides = [1, 1, 1]} : vector<2x8x32xf32> to vector<2x8x8xf32>
    %62 = vector.extract_strided_slice %17 {offsets = [0, 0, 24], sizes = [2, 8, 8], strides = [1, 1, 1]} : vector<2x8x32xf32> to vector<2x8x8xf32>
    %63 = vector.extract_strided_slice %18 {offsets = [0, 0, 24], sizes = [2, 8, 8], strides = [1, 1, 1]} : vector<2x8x32xf32> to vector<2x8x8xf32>
    "tpu.trace_start"() <{level = 10 : i32, message = "bqd,bkd->bqk"}> : () -> ()
    %cst_26 = arith.constant dense<0.000000e+00> : vector<2x8x8xf32>
    %64 = tpu.matmul %61, %62, %cst_26 {dimension_numbers = #tpu.dot_dimension_numbers<[2], [2], [1], [1], [0, 0, 0, 1, 1, 1], [0], [0]>} : vector<2x8x8xf32>, vector<2x8x8xf32>, vector<2x8x8xf32> -> vector<2x8x8xf32>
    "tpu.trace_stop"() : () -> ()
    %cst_27 = arith.constant dense<0xFF800000> : vector<2x8xf32>
    %65 = vector.multi_reduction <maximumf>, %64, %cst_27 [2] : vector<2x8x8xf32> to vector<2x8xf32>
    %66 = vector.shape_cast %65 : vector<2x8xf32> to vector<2x8x1xf32>
    %67 = vector.broadcast %66 : vector<2x8x1xf32> to vector<2x8x8xf32>
    %68 = arith.subf %64, %67 : vector<2x8x8xf32>
    %69 = math.exp %68 : vector<2x8x8xf32>
    %cst_28 = arith.constant dense<0.000000e+00> : vector<2x8xf32>
    %70 = vector.multi_reduction <add>, %69, %cst_28 [2] : vector<2x8x8xf32> to vector<2x8xf32>
    %71 = vector.shape_cast %70 : vector<2x8xf32> to vector<2x8x1xf32>
    %72 = vector.broadcast %71 : vector<2x8x1xf32> to vector<2x8x8xf32>
    %73 = arith.divf %69, %72 : vector<2x8x8xf32>
    "tpu.trace_start"() <{level = 10 : i32, message = "bqk,bkd->bqd"}> : () -> ()
    %cst_29 = arith.constant dense<0.000000e+00> : vector<2x8x8xf32>
    %74 = tpu.matmul %73, %63, %cst_29 {dimension_numbers = #tpu.dot_dimension_numbers<[2], [1], [1], [2], [0, 0, 0, 1, 1, 2], [0], [0]>} : vector<2x8x8xf32>, vector<2x8x8xf32>, vector<2x8x8xf32> -> vector<2x8x8xf32>
    "tpu.trace_stop"() : () -> ()
    %75 = tpu.concatenate %32, %46, %60, %74 in 2 : vector<2x8x8xf32>, vector<2x8x8xf32>, vector<2x8x8xf32>, vector<2x8x8xf32> -> vector<2x8x32xf32>
    %76 = vector.shape_cast %75 : vector<2x8x32xf32> to vector<16x32xf32>
    %c0_30 = arith.constant 0 : index
    %c0_31 = arith.constant 0 : index
    %77 = vector.load %arg7[%c0_30, %c0_31] : memref<32x32xf32, #tpu.memory_space<vmem>>, vector<32x32xf32>
    %cst_32 = arith.constant dense<0.000000e+00> : vector<16x32xf32>
    %78 = tpu.matmul %76, %77, %cst_32 {dimension_numbers = #tpu.dot_dimension_numbers<[1], [0], [0], [1], [0, 0, 1, 1], [], []>} : vector<16x32xf32>, vector<32x32xf32>, vector<16x32xf32> -> vector<16x32xf32>
    %c0_33 = arith.constant 0 : index
    %c0_34 = arith.constant 0 : index
    %79 = vector.load %arg8[%c0_33, %c0_34] : memref<1x32xf32, #tpu.memory_space<vmem>>, vector<1x32xf32>
    %80 = vector.broadcast %79 : vector<1x32xf32> to vector<16x32xf32>
    %81 = arith.addf %78, %80 : vector<16x32xf32>
    %82 = arith.addf %1, %81 : vector<16x32xf32>
    %cst_35 = arith.constant dense<0.000000e+00> : vector<16xf32>
    %83 = vector.multi_reduction <add>, %82, %cst_35 [1] : vector<16x32xf32> to vector<16xf32>
    %84 = vector.shape_cast %83 : vector<16xf32> to vector<16x1xf32>
    %cst_36 = arith.constant 3.200000e+01 : f32
    %85 = vector.broadcast %cst_36 : f32 to vector<16x1xf32>
    %86 = arith.divf %84, %85 : vector<16x1xf32>
    %87 = vector.broadcast %86 : vector<16x1xf32> to vector<16x32xf32>
    %88 = arith.subf %82, %87 : vector<16x32xf32>
    %89 = arith.mulf %88, %88 : vector<16x32xf32>
    %cst_37 = arith.constant dense<0.000000e+00> : vector<16xf32>
    %90 = vector.multi_reduction <add>, %89, %cst_37 [1] : vector<16x32xf32> to vector<16xf32>
    %91 = vector.shape_cast %90 : vector<16xf32> to vector<16x1xf32>
    %cst_38 = arith.constant 3.200000e+01 : f32
    %92 = vector.broadcast %cst_38 : f32 to vector<16x1xf32>
    %93 = arith.divf %91, %92 : vector<16x1xf32>
    %94 = vector.broadcast %86 : vector<16x1xf32> to vector<16x32xf32>
    %95 = arith.subf %82, %94 : vector<16x32xf32>
    %cst_39 = arith.constant 9.99999974E-6 : f32
    %96 = vector.broadcast %cst_39 : f32 to vector<16x1xf32>
    %97 = arith.addf %93, %96 : vector<16x1xf32>
    %98 = math.rsqrt %97 : vector<16x1xf32>
    %99 = vector.broadcast %98 : vector<16x1xf32> to vector<16x32xf32>
    %100 = arith.mulf %95, %99 : vector<16x32xf32>
    %c0_40 = arith.constant 0 : index
    %c0_41 = arith.constant 0 : index
    %101 = vector.load %arg9[%c0_40, %c0_41] : memref<1x32xf32, #tpu.memory_space<vmem>>, vector<1x32xf32>
    %102 = vector.broadcast %101 : vector<1x32xf32> to vector<16x32xf32>
    %103 = arith.mulf %100, %102 : vector<16x32xf32>
    %c0_42 = arith.constant 0 : index
    %c0_43 = arith.constant 0 : index
    %104 = vector.load %arg10[%c0_42, %c0_43] : memref<1x32xf32, #tpu.memory_space<vmem>>, vector<1x32xf32>
    %105 = vector.broadcast %104 : vector<1x32xf32> to vector<16x32xf32>
    %106 = arith.addf %103, %105 : vector<16x32xf32>
    %c0_44 = arith.constant 0 : index
    %c0_45 = arith.constant 0 : index
    %107 = vector.load %arg11[%c0_44, %c0_45] : memref<32x128xf32, #tpu.memory_space<vmem>>, vector<32x128xf32>
    %cst_46 = arith.constant dense<0.000000e+00> : vector<16x128xf32>
    %108 = tpu.matmul %106, %107, %cst_46 {dimension_numbers = #tpu.dot_dimension_numbers<[1], [0], [0], [1], [0, 0, 1, 1], [], []>} : vector<16x32xf32>, vector<32x128xf32>, vector<16x128xf32> -> vector<16x128xf32>
    %c0_47 = arith.constant 0 : index
    %c0_48 = arith.constant 0 : index
    %109 = vector.load %arg12[%c0_47, %c0_48] : memref<1x128xf32, #tpu.memory_space<vmem>>, vector<1x128xf32>
    %110 = vector.broadcast %109 : vector<1x128xf32> to vector<16x128xf32>
    %111 = arith.addf %108, %110 : vector<16x128xf32>
    %cst_49 = arith.constant 0.000000e+00 : f32
    %112 = vector.broadcast %cst_49 : f32 to vector<16x128xf32>
    %113 = arith.maximumf %111, %112 : vector<16x128xf32>
    %c0_50 = arith.constant 0 : index
    %c0_51 = arith.constant 0 : index
    %114 = vector.load %arg13[%c0_50, %c0_51] : memref<128x32xf32, #tpu.memory_space<vmem>>, vector<128x32xf32>
    %cst_52 = arith.constant dense<0.000000e+00> : vector<16x32xf32>
    %115 = tpu.matmul %113, %114, %cst_52 {dimension_numbers = #tpu.dot_dimension_numbers<[1], [0], [0], [1], [0, 0, 1, 1], [], []>} : vector<16x128xf32>, vector<128x32xf32>, vector<16x32xf32> -> vector<16x32xf32>
    %c0_53 = arith.constant 0 : index
    %c0_54 = arith.constant 0 : index
    %116 = vector.load %arg14[%c0_53, %c0_54] : memref<1x32xf32, #tpu.memory_space<vmem>>, vector<1x32xf32>
    %117 = vector.broadcast %116 : vector<1x32xf32> to vector<16x32xf32>
    %118 = arith.addf %115, %117 : vector<16x32xf32>
    %119 = arith.addf %106, %118 : vector<16x32xf32>
    %cst_55 = arith.constant dense<0.000000e+00> : vector<16xf32>
    %120 = vector.multi_reduction <add>, %119, %cst_55 [1] : vector<16x32xf32> to vector<16xf32>
    %121 = vector.shape_cast %120 : vector<16xf32> to vector<16x1xf32>
    %cst_56 = arith.constant 3.200000e+01 : f32
    %122 = vector.broadcast %cst_56 : f32 to vector<16x1xf32>
    %123 = arith.divf %121, %122 : vector<16x1xf32>
    %124 = vector.broadcast %123 : vector<16x1xf32> to vector<16x32xf32>
    %125 = arith.subf %119, %124 : vector<16x32xf32>
    %126 = arith.mulf %125, %125 : vector<16x32xf32>
    %cst_57 = arith.constant dense<0.000000e+00> : vector<16xf32>
    %127 = vector.multi_reduction <add>, %126, %cst_57 [1] : vector<16x32xf32> to vector<16xf32>
    %128 = vector.shape_cast %127 : vector<16xf32> to vector<16x1xf32>
    %cst_58 = arith.constant 3.200000e+01 : f32
    %129 = vector.broadcast %cst_58 : f32 to vector<16x1xf32>
    %130 = arith.divf %128, %129 : vector<16x1xf32>
    %131 = vector.broadcast %123 : vector<16x1xf32> to vector<16x32xf32>
    %132 = arith.subf %119, %131 : vector<16x32xf32>
    %cst_59 = arith.constant 9.99999974E-6 : f32
    %133 = vector.broadcast %cst_59 : f32 to vector<16x1xf32>
    %134 = arith.addf %130, %133 : vector<16x1xf32>
    %135 = math.rsqrt %134 : vector<16x1xf32>
    %136 = vector.broadcast %135 : vector<16x1xf32> to vector<16x32xf32>
    %137 = arith.mulf %132, %136 : vector<16x32xf32>
    %c0_60 = arith.constant 0 : index
    %c0_61 = arith.constant 0 : index
    %138 = vector.load %arg15[%c0_60, %c0_61] : memref<1x32xf32, #tpu.memory_space<vmem>>, vector<1x32xf32>
    %139 = vector.broadcast %138 : vector<1x32xf32> to vector<16x32xf32>
    %140 = arith.mulf %137, %139 : vector<16x32xf32>
    %c0_62 = arith.constant 0 : index
    %c0_63 = arith.constant 0 : index
    %141 = vector.load %arg16[%c0_62, %c0_63] : memref<1x32xf32, #tpu.memory_space<vmem>>, vector<1x32xf32>
    %142 = vector.broadcast %141 : vector<1x32xf32> to vector<16x32xf32>
    %143 = arith.addf %140, %142 : vector<16x32xf32>
    %c0_64 = arith.constant 0 : index
    %c0_65 = arith.constant 0 : index
    %c0_66 = arith.constant 0 : index
    %144 = vector.load %arg17[%c0_64, %c0_65, %c0_66] : memref<1x16x32xf32, #tpu.memory_space<vmem>>, vector<1x16x32xf32>
    %145 = vector.shape_cast %144 : vector<1x16x32xf32> to vector<16x32xf32>
    %146 = vector.shape_cast %143 : vector<16x32xf32> to vector<1x16x32xf32>
    tpu.vector_store %arg17[%c0_64, %c0_65, %c0_66], %146 {strides = array<i32>} : memref<1x16x32xf32, #tpu.memory_space<vmem>>, vector<1x16x32xf32>,
    return
  }
  func.func @transform_0(%arg0: i32) -> (i32, i32, i32) {
    %c0_i32 = arith.constant 0 : i32
    %c0_i32_0 = arith.constant 0 : i32
    %c0_i32_1 = arith.constant 0 : i32
    return %arg0, %c0_i32, %c0_i32_0 : i32, i32, i32
  }
  func.func @transform_1(%arg0: i32) -> (i32, i32, i32) {
    %c0_i32 = arith.constant 0 : i32
    %c0_i32_0 = arith.constant 0 : i32
    %c0_i32_1 = arith.constant 0 : i32
    return %arg0, %c0_i32, %c0_i32_0 : i32, i32, i32
  }
  func.func @transform_2(%arg0: i32) -> (i32, i32) {
    %c0_i32 = arith.constant 0 : i32
    %c0_i32_0 = arith.constant 0 : i32
    %c0_i32_1 = arith.constant 0 : i32
    return %c0_i32, %c0_i32_0 : i32, i32
  }
  func.func @transform_3(%arg0: i32) -> (i32, i32) {
    %c0_i32 = arith.constant 0 : i32
    %c0_i32_0 = arith.constant 0 : i32
    %c0_i32_1 = arith.constant 0 : i32
    return %c0_i32, %c0_i32_0 : i32, i32
  }
  func.func @transform_4(%arg0: i32) -> (i32, i32) {
    %c0_i32 = arith.constant 0 : i32
    %c0_i32_0 = arith.constant 0 : i32
    %c0_i32_1 = arith.constant 0 : i32
    return %c0_i32, %c0_i32_0 : i32, i32
  }
  func.func @transform_5(%arg0: i32) -> (i32, i32) {
    %c0_i32 = arith.constant 0 : i32
    %c0_i32_0 = arith.constant 0 : i32
    %c0_i32_1 = arith.constant 0 : i32
    return %c0_i32, %c0_i32_0 : i32, i32
  }
  func.func @transform_6(%arg0: i32) -> (i32, i32) {
    %c0_i32 = arith.constant 0 : i32
    %c0_i32_0 = arith.constant 0 : i32
    %c0_i32_1 = arith.constant 0 : i32
    return %c0_i32, %c0_i32_0 : i32, i32
  }
  func.func @transform_7(%arg0: i32) -> (i32, i32) {
    %c0_i32 = arith.constant 0 : i32
    %c0_i32_0 = arith.constant 0 : i32
    %c0_i32_1 = arith.constant 0 : i32
    return %c0_i32, %c0_i32_0 : i32, i32
  }
  func.func @transform_8(%arg0: i32) -> (i32, i32) {
    %c0_i32 = arith.constant 0 : i32
    %c0_i32_0 = arith.constant 0 : i32
    %c0_i32_1 = arith.constant 0 : i32
    return %c0_i32, %c0_i32_0 : i32, i32
  }
  func.func @transform_9(%arg0: i32) -> (i32, i32) {
    %c0_i32 = arith.constant 0 : i32
    %c0_i32_0 = arith.constant 0 : i32
    %c0_i32_1 = arith.constant 0 : i32
    return %c0_i32, %c0_i32_0 : i32, i32
  }
  func.func @transform_10(%arg0: i32) -> (i32, i32) {
    %c0_i32 = arith.constant 0 : i32
    %c0_i32_0 = arith.constant 0 : i32
    %c0_i32_1 = arith.constant 0 : i32
    return %c0_i32, %c0_i32_0 : i32, i32
  }
  func.func @transform_11(%arg0: i32) -> (i32, i32) {
    %c0_i32 = arith.constant 0 : i32
    %c0_i32_0 = arith.constant 0 : i32
    %c0_i32_1 = arith.constant 0 : i32
    return %c0_i32, %c0_i32_0 : i32, i32
  }
  func.func @transform_12(%arg0: i32) -> (i32, i32) {
    %c0_i32 = arith.constant 0 : i32
    %c0_i32_0 = arith.constant 0 : i32
    %c0_i32_1 = arith.constant 0 : i32
    return %c0_i32, %c0_i32_0 : i32, i32
  }
  func.func @transform_13(%arg0: i32) -> (i32, i32) {
    %c0_i32 = arith.constant 0 : i32
    %c0_i32_0 = arith.constant 0 : i32
    %c0_i32_1 = arith.constant 0 : i32
    return %c0_i32, %c0_i32_0 : i32, i32
  }
  func.func @transform_14(%arg0: i32) -> (i32, i32) {
    %c0_i32 = arith.constant 0 : i32
    %c0_i32_0 = arith.constant 0 : i32
    %c0_i32_1 = arith.constant 0 : i32
    return %c0_i32, %c0_i32_0 : i32, i32
  }
  func.func @transform_15(%arg0: i32) -> (i32, i32) {
    %c0_i32 = arith.constant 0 : i32
    %c0_i32_0 = arith.constant 0 : i32
    %c0_i32_1 = arith.constant 0 : i32
    return %c0_i32, %c0_i32_0 : i32, i32
  }
  func.func @transform_16(%arg0: i32) -> (i32, i32, i32) {
    %c0_i32 = arith.constant 0 : i32
    %c0_i32_0 = arith.constant 0 : i32
    %c0_i32_1 = arith.constant 0 : i32
    return %arg0, %c0_i32, %c0_i32_0 : i32, i32, i32
  }
}

</mosaic_0001>

<llo_original>
// kernel: tpu_custom_call.1
$region0: #{tpu_custom_call.1}
  #allocation0 [shape = 'u32[]', space=smem, size = 0x4, offset = 0x4, fixed_abs, tag = 'smem constant byte address 0x4 - core index']
  #allocation1 [shape = 'u32[72,128]{1,0:T(1,128)}', space=vmem, size = 0x9000, scoped, tag = 'internal scratch']
  %s0 = inlined_call_operand.vmem [shape: f32[1,16,32], index: 0, kind: input, shape index: {}]
  %s1 = inlined_call_operand.vmem [shape: f32[1,16,32], index: 1, kind: input, shape index: {}]
  %s2 = inlined_call_operand.vmem [shape: f32[32,32], index: 2, kind: input, shape index: {}]
  %s3 = inlined_call_operand.vmem [shape: f32[1,32], index: 3, kind: input, shape index: {}]
  %s4 = inlined_call_operand.vmem [shape: f32[32,64], index: 4, kind: input, shape index: {}]
  %s5 = inlined_call_operand.vmem [shape: f32[1,64], index: 5, kind: input, shape index: {}]
  %s6 = inlined_call_operand.vmem [shape: f32[32,32], index: 6, kind: input, shape index: {}]
  %s7 = inlined_call_operand.vmem [shape: f32[1,32], index: 7, kind: input, shape index: {}]
  %s8 = inlined_call_operand.vmem [shape: f32[1,32], index: 8, kind: input, shape index: {}]
  %s9 = inlined_call_operand.vmem [shape: f32[1,32], index: 9, kind: input, shape index: {}]
  %s10 = inlined_call_operand.vmem [shape: f32[32,128], index: 10, kind: input, shape index: {}]
  %s11 = inlined_call_operand.vmem [shape: f32[1,128], index: 11, kind: input, shape index: {}]
  %s12 = inlined_call_operand.vmem [shape: f32[128,32], index: 12, kind: input, shape index: {}]
  %s13 = inlined_call_operand.vmem [shape: f32[1,32], index: 13, kind: input, shape index: {}]
  %s14 = inlined_call_operand.vmem [shape: f32[1,32], index: 14, kind: input, shape index: {}]
  %s15 = inlined_call_operand.vmem [shape: f32[1,32], index: 15, kind: input, shape index: {}]
  %s16 = inlined_call_operand.hbm [shape: f32[1,16,32], index: 16, kind: output, shape index: {}]
  %s17 = sld [smem:[#allocation0]]
  $region74: #{tpu_custom_call.1} parent=0
    _
  %s19 = ssub.s32 1, %s17
  %s20 = scalar_select 0, %s19, %s17
  $region1: #{tpu_custom_call.1} parent=0
    #allocation2 [shape = 'u8[8192]{0}', space=vmem, size = 0x2000, scoped, tag = 'output window, operand 0, single buffered']
    #allocation3 [shape = 's32[1]{0}', space=sflag, size = 0x4, scoped, tag = 'scoped memory for tpu_custom_call.1']
    %21 = vsyncpa [#allocation3], 0
    // Predicated region
    $region2: #{tpu_custom_call.1} parent=1 // pred_check
      _
    $region3: #{tpu_custom_call.1} parent=1 // pred_check_branch
      %23 = sbr.rel (0) target = $region5
    $region4: #{tpu_custom_call.1} parent=1 // pred_region
      _
    $region5: #{tpu_custom_call.1} parent=1 // pred_fallthru
      _
    // Predicated region
    $region6: #{tpu_custom_call.1} parent=1 // pred_check
      _
    $region7: #{tpu_custom_call.1} parent=1 // pred_check_branch
      %25 = sbr.rel (0) target = $region9
    $region8: #{tpu_custom_call.1} parent=1 // pred_region
      _
    $region9: #{tpu_custom_call.1} parent=1 // pred_fallthru
      _
    // Predicated region
    $region10: #{tpu_custom_call.1} parent=1 // pred_check
      _
    $region11: #{tpu_custom_call.1} parent=1 // pred_check_branch
      %27 = sbr.rel (0) target = $region13
    $region12: #{tpu_custom_call.1} parent=1 // pred_region
      _
    $region13: #{tpu_custom_call.1} parent=1 // pred_fallthru
      _
    // Predicated region
    $region14: #{tpu_custom_call.1} parent=1 // pred_check
      _
    $region15: #{tpu_custom_call.1} parent=1 // pred_check_branch
      %29 = sbr.rel (0) target = $region17
    $region16: #{tpu_custom_call.1} parent=1 // pred_region
      _
    $region17: #{tpu_custom_call.1} parent=1 // pred_fallthru
      _
    // Predicated region
    $region18: #{tpu_custom_call.1} parent=1 // pred_check
      _
    $region19: #{tpu_custom_call.1} parent=1 // pred_check_branch
      %31 = sbr.rel (0) target = $region21
    $region20: #{tpu_custom_call.1} parent=1 // pred_region
      _
    $region21: #{tpu_custom_call.1} parent=1 // pred_fallthru
      _
    // Predicated region
    $region22: #{tpu_custom_call.1} parent=1 // pred_check
      _
    $region23: #{tpu_custom_call.1} parent=1 // pred_check_branch
      %33 = sbr.rel (0) target = $region25
    $region24: #{tpu_custom_call.1} parent=1 // pred_region
      _
    $region25: #{tpu_custom_call.1} parent=1 // pred_fallthru
      _
    // Predicated region
    $region26: #{tpu_custom_call.1} parent=1 // pred_check
      _
    $region27: #{tpu_custom_call.1} parent=1 // pred_check_branch
      %35 = sbr.rel (0) target = $region29
    $region28: #{tpu_custom_call.1} parent=1 // pred_region
      _
    $region29: #{tpu_custom_call.1} parent=1 // pred_fallthru
      _
    // Predicated region
    $region30: #{tpu_custom_call.1} parent=1 // pred_check
      _
    $region31: #{tpu_custom_call.1} parent=1 // pred_check_branch
      %37 = sbr.rel (0) target = $region33
    $region32: #{tpu_custom_call.1} parent=1 // pred_region
      _
    $region33: #{tpu_custom_call.1} parent=1 // pred_fallthru
      _
    // Predicated region
    $region34: #{tpu_custom_call.1} parent=1 // pred_check
      _
    $region35: #{tpu_custom_call.1} parent=1 // pred_check_branch
      %39 = sbr.rel (0) target = $region37
    $region36: #{tpu_custom_call.1} parent=1 // pred_region
      _
    $region37: #{tpu_custom_call.1} parent=1 // pred_fallthru
      _
    // Predicated region
    $region38: #{tpu_custom_call.1} parent=1 // pred_check
      _
    $region39: #{tpu_custom_call.1} parent=1 // pred_check_branch
      %41 = sbr.rel (0) target = $region41
    $region40: #{tpu_custom_call.1} parent=1 // pred_region
      _
    $region41: #{tpu_custom_call.1} parent=1 // pred_fallthru
      _
    // Predicated region
    $region42: #{tpu_custom_call.1} parent=1 // pred_check
      _
    $region43: #{tpu_custom_call.1} parent=1 // pred_check_branch
      %43 = sbr.rel (0) target = $region45
    $region44: #{tpu_custom_call.1} parent=1 // pred_region
      _
    $region45: #{tpu_custom_call.1} parent=1 // pred_fallthru
      _
    // Predicated region
    $region46: #{tpu_custom_call.1} parent=1 // pred_check
      _
    $region47: #{tpu_custom_call.1} parent=1 // pred_check_branch
      %45 = sbr.rel (0) target = $region49
    $region48: #{tpu_custom_call.1} parent=1 // pred_region
      _
    $region49: #{tpu_custom_call.1} parent=1 // pred_fallthru
      _
    // Predicated region
    $region50: #{tpu_custom_call.1} parent=1 // pred_check
      _
    $region51: #{tpu_custom_call.1} parent=1 // pred_check_branch
      %47 = sbr.rel (0) target = $region53
    $region52: #{tpu_custom_call.1} parent=1 // pred_region
      _
    $region53: #{tpu_custom_call.1} parent=1 // pred_fallthru
      _
    // Predicated region
    $region54: #{tpu_custom_call.1} parent=1 // pred_check
      _
    $region55: #{tpu_custom_call.1} parent=1 // pred_check_branch
      %49 = sbr.rel (0) target = $region57
    $region56: #{tpu_custom_call.1} parent=1 // pred_region
      _
    $region57: #{tpu_custom_call.1} parent=1 // pred_fallthru
      _
    // Predicated region
    $region58: #{tpu_custom_call.1} parent=1 // pred_check
      _
    $region59: #{tpu_custom_call.1} parent=1 // pred_check_branch
      %51 = sbr.rel (0) target = $region61
    $region60: #{tpu_custom_call.1} parent=1 // pred_region
      _
    $region61: #{tpu_custom_call.1} parent=1 // pred_fallthru
      _
    // Predicated region
    $region62: #{tpu_custom_call.1} parent=1 // pred_check
      _
    $region63: #{tpu_custom_call.1} parent=1 // pred_check_branch
      %53 = sbr.rel (0) target = $region65
    $region64: #{tpu_custom_call.1} parent=1 // pred_region
      _
    $region65: #{tpu_custom_call.1} parent=1 // pred_fallthru
      _
    %v54 = vld [vmem:[%s0] sm:$0xff]
    %v55 = vld [vmem:[%s0 + $0x8] sm:$0xff]
    %v56 = vld [vmem:[%s1] sm:$0xff]
    %v57 = vld [vmem:[%s1 + $0x8] sm:$0xff]
    %v58 = vld [vmem:[%s2] sm:$0xff]
    %v59 = vld [vmem:[%s2 + $0x8] sm:$0xff]
    %v60 = vld [vmem:[%s2 + $0x10] sm:$0xff]
    %v61 = vld [vmem:[%s2 + $0x18] sm:$0xff]
    %v62 = vld [vmem:[%s3] sm:$0x1]
    %v64 = vperm.slane %v62, 0
    %vm66 = vcmask 261120
    %v68 = vsel %vm66, %v54, 0
    %v71 = vsel %vm66, %v55, 0
    %73 = vmatpush.msra.mxu0 0.0
    %74 = vmatpush.msra.mxu0 0.0
    %75 = vmatpush.msra.mxu0 0.0
    %76 = vmatpush.msra.mxu0 0.0
    %77 = vmatpush.msra.mxu0 0.0
    %78 = vmatpush.msra.mxu0 0.0
    %79 = vmatpush.msra.mxu0 0.0
    %80 = vmatpush.msra.mxu0 0.0
    %81 = vmatpush.msra.mxu0 0.0
    %82 = vmatpush.msra.mxu0 0.0
    %83 = vmatpush.msra.mxu0 0.0
    %84 = vmatpush.msra.mxu0 0.0
    %85 = vmatpush.msra.mxu0 %v61
    %86 = vmatpush.msra.mxu0 %v60
    %87 = vmatpush.msra.mxu0 %v59
    %88 = vmatpush.msra.mxu0 %v58
    %89 = vmatmul.f32.gmra.mxu0 %v68
    %v90 = vpop.f32.mrf.mxu0
    %v91 = vadd.f32 %v64, %v90
    %92 = vmatmul.f32.gmra.mxu0 %v71
    %v93 = vpop.f32.mrf.mxu0
    %v94 = vadd.f32 %v64, %v93
    %95 = vdwg.mxu0
    %v96 = vld [vmem:[%s4] sm:$0xff]
    %v97 = vld [vmem:[%s4 + $0x8] sm:$0xff]
    %v98 = vld [vmem:[%s4 + $0x10] sm:$0xff]
    %v99 = vld [vmem:[%s4 + $0x18] sm:$0xff]
    %v100 = vld [vmem:[%s5] sm:$0x1]
    %v102 = vperm.slane %v100, 0
    %v105 = vsel %vm66, %v56, 0
    %v108 = vsel %vm66, %v57, 0
    %110 = vmatpush.msra.mxu0 0.0
    %111 = vmatpush.msra.mxu0 0.0
    %112 = vmatpush.msra.mxu0 0.0
    %113 = vmatpush.msra.mxu0 0.0
    %114 = vmatpush.msra.mxu0 0.0
    %115 = vmatpush.msra.mxu0 0.0
    %116 = vmatpush.msra.mxu0 0.0
    %117 = vmatpush.msra.mxu0 0.0
    %118 = vmatpush.msra.mxu0 0.0
    %119 = vmatpush.msra.mxu0 0.0
    %120 = vmatpush.msra.mxu0 0.0
    %121 = vmatpush.msra.mxu0 0.0
    %122 = vmatpush.msra.mxu0 %v99
    %123 = vmatpush.msra.mxu0 %v98
    %124 = vmatpush.msra.mxu0 %v97
    %125 = vmatpush.msra.mxu0 %v96
    %126 = vmatmul.f32.gmra.mxu0 %v105
    %v127 = vpop.f32.mrf.mxu0
    %v128 = vadd.f32 %v102, %v127
    %129 = vmatmul.f32.gmra.mxu0 %v108
    %v130 = vpop.f32.mrf.mxu0
    %v131 = vadd.f32 %v102, %v130
    %132 = vdwg.mxu0
    %vm133 = vcmask 64512
    %v135 = vsel %vm133, %v91, 0
    %v138 = vsel %vm133, %v128, 0
    %140 = vmatpush.xpose.msra.mxu0 0.0
    %141 = vmatpush.xpose.msra.mxu0 0.0
    %142 = vmatpush.xpose.msra.mxu0 0.0
    %143 = vmatpush.xpose.msra.mxu0 0.0
    %144 = vmatpush.xpose.msra.mxu0 0.0
    %145 = vmatpush.xpose.msra.mxu0 0.0
    %146 = vmatpush.xpose.msra.mxu0 0.0
    %147 = vmatpush.xpose.msra.mxu0 0.0
    %148 = vmatpush.xpose.msra.mxu0 0.0
    %149 = vmatpush.xpose.msra.mxu0 0.0
    %150 = vmatpush.xpose.msra.mxu0 0.0
    %151 = vmatpush.xpose.msra.mxu0 0.0
    %152 = vmatpush.xpose.msra.mxu0 0.0
    %153 = vmatpush.xpose.msra.mxu0 0.0
    %154 = vmatpush.xpose.msra.mxu0 0.0
    %155 = vmatpush.xpose.msra.mxu0 %v138
    %156 = vmatmul.f32.gmra.mxu0 %v135
    %v157 = vpop.f32.mrf.mxu0
    %v158 = vadd.f32 0.0, %v157
    %159 = vdwg.mxu0
    %v161 = vsel %vm133, %v94, 0
    %v164 = vsel %vm133, %v131, 0
    %166 = vmatpush.xpose.msra.mxu0 0.0
    %167 = vmatpush.xpose.msra.mxu0 0.0
    %168 = vmatpush.xpose.msra.mxu0 0.0
    %169 = vmatpush.xpose.msra.mxu0 0.0
    %170 = vmatpush.xpose.msra.mxu0 0.0
    %171 = vmatpush.xpose.msra.mxu0 0.0
    %172 = vmatpush.xpose.msra.mxu0 0.0
    %173 = vmatpush.xpose.msra.mxu0 0.0
    %174 = vmatpush.xpose.msra.mxu0 0.0
    %175 = vmatpush.xpose.msra.mxu0 0.0
    %176 = vmatpush.xpose.msra.mxu0 0.0
    %177 = vmatpush.xpose.msra.mxu0 0.0
    %178 = vmatpush.xpose.msra.mxu0 0.0
    %179 = vmatpush.xpose.msra.mxu0 0.0
    %180 = vmatpush.xpose.msra.mxu0 0.0
    %181 = vmatpush.xpose.msra.mxu0 %v164
    %182 = vmatmul.f32.gmra.mxu0 %v161
    %v183 = vpop.f32.mrf.mxu0
    %v184 = vadd.f32 0.0, %v183
    %185 = vdwg.mxu0
    %v186 = vsel %vm133, %v158, -inf
    %187 = vmax.xlane.f32.xlu0 %v186
    %v188 = vpop.xlane.xlu0 %187
    %v189 = vsel %vm133, %v184, -inf
    %190 = vmax.xlane.f32.xlu0 %v189
    %v191 = vpop.xlane.xlu0 %190
    %v192 = vsub.f32 %v158, %v188
    %v193 = vsub.f32 %v184, %v191
    %v194 = vmul.f32 %v192, 1.442695
    %v195 = vpow.pop %v194
    %v196 = vmul.f32 %v193, 1.442695
    %v197 = vpow.pop %v196
    %v198 = vsel %vm133, %v195, 0.0
    %199 = vadd.xlane.f32.xlu0 %v198
    %v200 = vpop.xlane.xlu0 %199
    %v201 = vsel %vm133, %v197, 0.0
    %202 = vadd.xlane.f32.xlu0 %v201
    %v203 = vpop.xlane.xlu0 %202
    %v204 = vrcp.pop %v200
    %v205 = vmul.f32 %v200, %v204
    %v206 = vsub.f32 1.0, %v205
    %v207 = vmul.f32 %v204, %v206
    %v208 = vadd.f32 %v204, %v207
    %vm209 = vweird.f32 %v200
    %vm210 = vweird.f32 %v204
    %vm211 = vmor %vm209, %vm210
    %v212 = vsel %vm211, %v204, %v208
    %v213 = vand.u32 2147483647, %v200
    %vm214 = vcmp.eq.f32.partialorder %v213, 8.507059e+37
    %v215 = vand.u32 %v200, 2147483648
    %v216 = vor.u32 1.1754944e-38, %v215
    %v217 = vsel %vm214, %v216, %v212
    %v218 = vmul.f32 %v195, %v217
    %v219 = vrcp.pop %v203
    %v220 = vmul.f32 %v203, %v219
    %v221 = vsub.f32 1.0, %v220
    %v222 = vmul.f32 %v219, %v221
    %v223 = vadd.f32 %v219, %v222
    %vm224 = vweird.f32 %v203
    %vm225 = vweird.f32 %v219
    %vm226 = vmor %vm224, %vm225
    %v227 = vsel %vm226, %v219, %v223
    %v228 = vand.u32 2147483647, %v203
    %vm229 = vcmp.eq.f32.partialorder %v228, 8.507059e+37
    %v230 = vand.u32 %v203, 2147483648
    %v231 = vor.u32 1.1754944e-38, %v230
    %v232 = vsel %vm229, %v231, %v227
    %v233 = vmul.f32 %v197, %v232
    %234 = vrot.lane.b32.xlu0 %v128, 96
    %v235 = vpop.permute.xlu0 %234
    %v238 = vsel %vm133, %v218, 0
    %240 = vmatpush.msra.mxu0 0.0
    %241 = vmatpush.msra.mxu0 0.0
    %242 = vmatpush.msra.mxu0 0.0
    %243 = vmatpush.msra.mxu0 0.0
    %244 = vmatpush.msra.mxu0 0.0
    %245 = vmatpush.msra.mxu0 0.0
    %246 = vmatpush.msra.mxu0 0.0
    %247 = vmatpush.msra.mxu0 0.0
    %248 = vmatpush.msra.mxu0 0.0
    %249 = vmatpush.msra.mxu0 0.0
    %250 = vmatpush.msra.mxu0 0.0
    %251 = vmatpush.msra.mxu0 0.0
    %252 = vmatpush.msra.mxu0 0.0
    %253 = vmatpush.msra.mxu0 0.0
    %254 = vmatpush.msra.mxu0 0.0
    %255 = vmatpush.msra.mxu0 %v235
    %256 = vmatmul.f32.gmra.mxu0 %v238
    %v257 = vpop.f32.mrf.mxu0
    %v258 = vadd.f32 0.0, %v257
    %259 = vdwg.mxu0
    %260 = vrot.lane.b32.xlu0 %v131, 96
    %v261 = vpop.permute.xlu0 %260
    %v264 = vsel %vm133, %v233, 0
    %266 = vmatpush.msra.mxu0 0.0
    %267 = vmatpush.msra.mxu0 0.0
    %268 = vmatpush.msra.mxu0 0.0
    %269 = vmatpush.msra.mxu0 0.0
    %270 = vmatpush.msra.mxu0 0.0
    %271 = vmatpush.msra.mxu0 0.0
    %272 = vmatpush.msra.mxu0 0.0
    %273 = vmatpush.msra.mxu0 0.0
    %274 = vmatpush.msra.mxu0 0.0
    %275 = vmatpush.msra.mxu0 0.0
    %276 = vmatpush.msra.mxu0 0.0
    %277 = vmatpush.msra.mxu0 0.0
    %278 = vmatpush.msra.mxu0 0.0
    %279 = vmatpush.msra.mxu0 0.0
    %280 = vmatpush.msra.mxu0 0.0
    %281 = vmatpush.msra.mxu0 %v261
    %282 = vmatmul.f32.gmra.mxu0 %v264
    %v283 = vpop.f32.mrf.mxu0
    %v284 = vadd.f32 0.0, %v283
    %285 = vdwg.mxu0
    %286 = vrot.lane.b32.xlu0 %v91, 120
    %v287 = vpop.permute.xlu0 %286
    %288 = vrot.lane.b32.xlu0 %v128, 120
    %v289 = vpop.permute.xlu0 %288
    %v290 = vsel %vm133, %v287, 0
    %v292 = vsel %vm133, %v289, 0
    %294 = vmatpush.xpose.msra.mxu0 0.0
    %295 = vmatpush.xpose.msra.mxu0 0.0
    %296 = vmatpush.xpose.msra.mxu0 0.0
    %297 = vmatpush.xpose.msra.mxu0 0.0
    %298 = vmatpush.xpose.msra.mxu0 0.0
    %299 = vmatpush.xpose.msra.mxu0 0.0
    %300 = vmatpush.xpose.msra.mxu0 0.0
    %301 = vmatpush.xpose.msra.mxu0 0.0
    %302 = vmatpush.xpose.msra.mxu0 0.0
    %303 = vmatpush.xpose.msra.mxu0 0.0
    %304 = vmatpush.xpose.msra.mxu0 0.0
    %305 = vmatpush.xpose.msra.mxu0 0.0
    %306 = vmatpush.xpose.msra.mxu0 0.0
    %307 = vmatpush.xpose.msra.mxu0 0.0
    %308 = vmatpush.xpose.msra.mxu0 0.0
    %309 = vmatpush.xpose.msra.mxu0 %v292
    %310 = vmatmul.f32.gmra.mxu0 %v290
    %v311 = vpop.f32.mrf.mxu0
    %v312 = vadd.f32 0.0, %v311
    %313 = vdwg.mxu0
    %314 = vrot.lane.b32.xlu0 %v94, 120
    %v315 = vpop.permute.xlu0 %314
    %316 = vrot.lane.b32.xlu0 %v131, 120
    %v317 = vpop.permute.xlu0 %316
    %v318 = vsel %vm133, %v315, 0
    %v320 = vsel %vm133, %v317, 0
    %322 = vmatpush.xpose.msra.mxu0 0.0
    %323 = vmatpush.xpose.msra.mxu0 0.0
    %324 = vmatpush.xpose.msra.mxu0 0.0
    %325 = vmatpush.xpose.msra.mxu0 0.0
    %326 = vmatpush.xpose.msra.mxu0 0.0
    %327 = vmatpush.xpose.msra.mxu0 0.0
    %328 = vmatpush.xpose.msra.mxu0 0.0
    %329 = vmatpush.xpose.msra.mxu0 0.0
    %330 = vmatpush.xpose.msra.mxu0 0.0
    %331 = vmatpush.xpose.msra.mxu0 0.0
    %332 = vmatpush.xpose.msra.mxu0 0.0
    %333 = vmatpush.xpose.msra.mxu0 0.0
    %334 = vmatpush.xpose.msra.mxu0 0.0
    %335 = vmatpush.xpose.msra.mxu0 0.0
    %336 = vmatpush.xpose.msra.mxu0 0.0
    %337 = vmatpush.xpose.msra.mxu0 %v320
    %338 = vmatmul.f32.gmra.mxu0 %v318
    %v339 = vpop.f32.mrf.mxu0
    %v340 = vadd.f32 0.0, %v339
    %341 = vdwg.mxu0
    %v342 = vsel %vm133, %v312, -inf
    %343 = vmax.xlane.f32.xlu0 %v342
    %v344 = vpop.xlane.xlu0 %343
    %v345 = vsel %vm133, %v340, -inf
    %346 = vmax.xlane.f32.xlu0 %v345
    %v347 = vpop.xlane.xlu0 %346
    %v348 = vsub.f32 %v312, %v344
    %v349 = vsub.f32 %v340, %v347
    %v350 = vmul.f32 %v348, 1.442695
    %v351 = vpow.pop %v350
    %v352 = vmul.f32 %v349, 1.442695
    %v353 = vpow.pop %v352
    %v354 = vsel %vm133, %v351, 0.0
    %355 = vadd.xlane.f32.xlu0 %v354
    %v356 = vpop.xlane.xlu0 %355
    %v357 = vsel %vm133, %v353, 0.0
    %358 = vadd.xlane.f32.xlu0 %v357
    %v359 = vpop.xlane.xlu0 %358
    %v360 = vrcp.pop %v356
    %v361 = vmul.f32 %v356, %v360
    %v362 = vsub.f32 1.0, %v361
    %v363 = vmul.f32 %v360, %v362
    %v364 = vadd.f32 %v360, %v363
    %vm365 = vweird.f32 %v356
    %vm366 = vweird.f32 %v360
    %vm367 = vmor %vm365, %vm366
    %v368 = vsel %vm367, %v360, %v364
    %v369 = vand.u32 2147483647, %v356
    %vm370 = vcmp.eq.f32.partialorder %v369, 8.507059e+37
    %v371 = vand.u32 %v356, 2147483648
    %v372 = vor.u32 1.1754944e-38, %v371
    %v373 = vsel %vm370, %v372, %v368
    %v374 = vmul.f32 %v351, %v373
    %v375 = vrcp.pop %v359
    %v376 = vmul.f32 %v359, %v375
    %v377 = vsub.f32 1.0, %v376
    %v378 = vmul.f32 %v375, %v377
    %v379 = vadd.f32 %v375, %v378
    %vm380 = vweird.f32 %v359
    %vm381 = vweird.f32 %v375
    %vm382 = vmor %vm380, %vm381
    %v383 = vsel %vm382, %v375, %v379
    %v384 = vand.u32 2147483647, %v359
    %vm385 = vcmp.eq.f32.partialorder %v384, 8.507059e+37
    %v386 = vand.u32 %v359, 2147483648
    %v387 = vor.u32 1.1754944e-38, %v386
    %v388 = vsel %vm385, %v387, %v383
    %v389 = vmul.f32 %v353, %v388
    %390 = vrot.lane.b32.xlu0 %v128, 88
    %v391 = vpop.permute.xlu0 %390
    %v394 = vsel %vm133, %v374, 0
    %396 = vmatpush.msra.mxu0 0.0
    %397 = vmatpush.msra.mxu0 0.0
    %398 = vmatpush.msra.mxu0 0.0
    %399 = vmatpush.msra.mxu0 0.0
    %400 = vmatpush.msra.mxu0 0.0
    %401 = vmatpush.msra.mxu0 0.0
    %402 = vmatpush.msra.mxu0 0.0
    %403 = vmatpush.msra.mxu0 0.0
    %404 = vmatpush.msra.mxu0 0.0
    %405 = vmatpush.msra.mxu0 0.0
    %406 = vmatpush.msra.mxu0 0.0
    %407 = vmatpush.msra.mxu0 0.0
    %408 = vmatpush.msra.mxu0 0.0
    %409 = vmatpush.msra.mxu0 0.0
    %410 = vmatpush.msra.mxu0 0.0
    %411 = vmatpush.msra.mxu0 %v391
    %412 = vmatmul.f32.gmra.mxu0 %v394
    %v413 = vpop.f32.mrf.mxu0
    %v414 = vadd.f32 0.0, %v413
    %415 = vdwg.mxu0
    %416 = vrot.lane.b32.xlu0 %v131, 88
    %v417 = vpop.permute.xlu0 %416
    %v420 = vsel %vm133, %v389, 0
    %422 = vmatpush.msra.mxu0 0.0
    %423 = vmatpush.msra.mxu0 0.0
    %424 = vmatpush.msra.mxu0 0.0
    %425 = vmatpush.msra.mxu0 0.0
    %426 = vmatpush.msra.mxu0 0.0
    %427 = vmatpush.msra.mxu0 0.0
    %428 = vmatpush.msra.mxu0 0.0
    %429 = vmatpush.msra.mxu0 0.0
    %430 = vmatpush.msra.mxu0 0.0
    %431 = vmatpush.msra.mxu0 0.0
    %432 = vmatpush.msra.mxu0 0.0
    %433 = vmatpush.msra.mxu0 0.0
    %434 = vmatpush.msra.mxu0 0.0
    %435 = vmatpush.msra.mxu0 0.0
    %436 = vmatpush.msra.mxu0 0.0
    %437 = vmatpush.msra.mxu0 %v417
    %438 = vmatmul.f32.gmra.mxu0 %v420
    %v439 = vpop.f32.mrf.mxu0
    %v440 = vadd.f32 0.0, %v439
    %441 = vdwg.mxu0
    %442 = vrot.lane.b32.xlu0 %v91, 112
    %v443 = vpop.permute.xlu0 %442
    %444 = vrot.lane.b32.xlu0 %v128, 112
    %v445 = vpop.permute.xlu0 %444
    %v446 = vsel %vm133, %v443, 0
    %v448 = vsel %vm133, %v445, 0
    %450 = vmatpush.xpose.msra.mxu0 0.0
    %451 = vmatpush.xpose.msra.mxu0 0.0
    %452 = vmatpush.xpose.msra.mxu0 0.0
    %453 = vmatpush.xpose.msra.mxu0 0.0
    %454 = vmatpush.xpose.msra.mxu0 0.0
    %455 = vmatpush.xpose.msra.mxu0 0.0
    %456 = vmatpush.xpose.msra.mxu0 0.0
    %457 = vmatpush.xpose.msra.mxu0 0.0
    %458 = vmatpush.xpose.msra.mxu0 0.0
    %459 = vmatpush.xpose.msra.mxu0 0.0
    %460 = vmatpush.xpose.msra.mxu0 0.0
    %461 = vmatpush.xpose.msra.mxu0 0.0
    %462 = vmatpush.xpose.msra.mxu0 0.0
    %463 = vmatpush.xpose.msra.mxu0 0.0
    %464 = vmatpush.xpose.msra.mxu0 0.0
    %465 = vmatpush.xpose.msra.mxu0 %v448
    %466 = vmatmul.f32.gmra.mxu0 %v446
    %v467 = vpop.f32.mrf.mxu0
    %v468 = vadd.f32 0.0, %v467
    %469 = vdwg.mxu0
    %470 = vrot.lane.b32.xlu0 %v94, 112
    %v471 = vpop.permute.xlu0 %470
    %472 = vrot.lane.b32.xlu0 %v131, 112
    %v473 = vpop.permute.xlu0 %472
    %v474 = vsel %vm133, %v471, 0
    %v476 = vsel %vm133, %v473, 0
    %478 = vmatpush.xpose.msra.mxu0 0.0
    %479 = vmatpush.xpose.msra.mxu0 0.0
    %480 = vmatpush.xpose.msra.mxu0 0.0
    %481 = vmatpush.xpose.msra.mxu0 0.0
    %482 = vmatpush.xpose.msra.mxu0 0.0
    %483 = vmatpush.xpose.msra.mxu0 0.0
    %484 = vmatpush.xpose.msra.mxu0 0.0
    %485 = vmatpush.xpose.msra.mxu0 0.0
    %486 = vmatpush.xpose.msra.mxu0 0.0
    %487 = vmatpush.xpose.msra.mxu0 0.0
    %488 = vmatpush.xpose.msra.mxu0 0.0
    %489 = vmatpush.xpose.msra.mxu0 0.0
    %490 = vmatpush.xpose.msra.mxu0 0.0
    %491 = vmatpush.xpose.msra.mxu0 0.0
    %492 = vmatpush.xpose.msra.mxu0 0.0
    %493 = vmatpush.xpose.msra.mxu0 %v476
    %494 = vmatmul.f32.gmra.mxu0 %v474
    %v495 = vpop.f32.mrf.mxu0
    %v496 = vadd.f32 0.0, %v495
    %497 = vdwg.mxu0
    %v498 = vsel %vm133, %v468, -inf
    %499 = vmax.xlane.f32.xlu0 %v498
    %v500 = vpop.xlane.xlu0 %499
    %v501 = vsel %vm133, %v496, -inf
    %502 = vmax.xlane.f32.xlu0 %v501
    %v503 = vpop.xlane.xlu0 %502
    %v504 = vsub.f32 %v468, %v500
    %v505 = vsub.f32 %v496, %v503
    %v506 = vmul.f32 %v504, 1.442695
    %v507 = vpow.pop %v506
    %v508 = vmul.f32 %v505, 1.442695
    %v509 = vpow.pop %v508
    %v510 = vsel %vm133, %v507, 0.0
    %511 = vadd.xlane.f32.xlu0 %v510
    %v512 = vpop.xlane.xlu0 %511
    %v513 = vsel %vm133, %v509, 0.0
    %514 = vadd.xlane.f32.xlu0 %v513
    %v515 = vpop.xlane.xlu0 %514
    %v516 = vrcp.pop %v512
    %v517 = vmul.f32 %v512, %v516
    %v518 = vsub.f32 1.0, %v517
    %v519 = vmul.f32 %v516, %v518
    %v520 = vadd.f32 %v516, %v519
    %vm521 = vweird.f32 %v512
    %vm522 = vweird.f32 %v516
    %vm523 = vmor %vm521, %vm522
    %v524 = vsel %vm523, %v516, %v520
    %v525 = vand.u32 2147483647, %v512
    %vm526 = vcmp.eq.f32.partialorder %v525, 8.507059e+37
    %v527 = vand.u32 %v512, 2147483648
    %v528 = vor.u32 1.1754944e-38, %v527
    %v529 = vsel %vm526, %v528, %v524
    %v530 = vmul.f32 %v507, %v529
    %v531 = vrcp.pop %v515
    %v532 = vmul.f32 %v515, %v531
    %v533 = vsub.f32 1.0, %v532
    %v534 = vmul.f32 %v531, %v533
    %v535 = vadd.f32 %v531, %v534
    %vm536 = vweird.f32 %v515
    %vm537 = vweird.f32 %v531
    %vm538 = vmor %vm536, %vm537
    %v539 = vsel %vm538, %v531, %v535
    %v540 = vand.u32 2147483647, %v515
    %vm541 = vcmp.eq.f32.partialorder %v540, 8.507059e+37
    %v542 = vand.u32 %v515, 2147483648
    %v543 = vor.u32 1.1754944e-38, %v542
    %v544 = vsel %vm541, %v543, %v539
    %v545 = vmul.f32 %v509, %v544
    %546 = vrot.lane.b32.xlu0 %v128, 80
    %v547 = vpop.permute.xlu0 %546
    %v550 = vsel %vm133, %v530, 0
    %552 = vmatpush.msra.mxu0 0.0
    %553 = vmatpush.msra.mxu0 0.0
    %554 = vmatpush.msra.mxu0 0.0
    %555 = vmatpush.msra.mxu0 0.0
    %556 = vmatpush.msra.mxu0 0.0
    %557 = vmatpush.msra.mxu0 0.0
    %558 = vmatpush.msra.mxu0 0.0
    %559 = vmatpush.msra.mxu0 0.0
    %560 = vmatpush.msra.mxu0 0.0
    %561 = vmatpush.msra.mxu0 0.0
    %562 = vmatpush.msra.mxu0 0.0
    %563 = vmatpush.msra.mxu0 0.0
    %564 = vmatpush.msra.mxu0 0.0
    %565 = vmatpush.msra.mxu0 0.0
    %566 = vmatpush.msra.mxu0 0.0
    %567 = vmatpush.msra.mxu0 %v547
    %568 = vmatmul.f32.gmra.mxu0 %v550
    %v569 = vpop.f32.mrf.mxu0
    %v570 = vadd.f32 0.0, %v569
    %571 = vdwg.mxu0
    %572 = vrot.lane.b32.xlu0 %v131, 80
    %v573 = vpop.permute.xlu0 %572
    %v576 = vsel %vm133, %v545, 0
    %578 = vmatpush.msra.mxu0 0.0
    %579 = vmatpush.msra.mxu0 0.0
    %580 = vmatpush.msra.mxu0 0.0
    %581 = vmatpush.msra.mxu0 0.0
    %582 = vmatpush.msra.mxu0 0.0
    %583 = vmatpush.msra.mxu0 0.0
    %584 = vmatpush.msra.mxu0 0.0
    %585 = vmatpush.msra.mxu0 0.0
    %586 = vmatpush.msra.mxu0 0.0
    %587 = vmatpush.msra.mxu0 0.0
    %588 = vmatpush.msra.mxu0 0.0
    %589 = vmatpush.msra.mxu0 0.0
    %590 = vmatpush.msra.mxu0 0.0
    %591 = vmatpush.msra.mxu0 0.0
    %592 = vmatpush.msra.mxu0 0.0
    %593 = vmatpush.msra.mxu0 %v573
    %594 = vmatmul.f32.gmra.mxu0 %v576
    %v595 = vpop.f32.mrf.mxu0
    %v596 = vadd.f32 0.0, %v595
    %597 = vdwg.mxu0
    %598 = vrot.lane.b32.xlu0 %v91, 104
    %v599 = vpop.permute.xlu0 %598
    %600 = vrot.lane.b32.xlu0 %v128, 104
    %v601 = vpop.permute.xlu0 %600
    %v602 = vsel %vm133, %v599, 0
    %v604 = vsel %vm133, %v601, 0
    %606 = vmatpush.xpose.msra.mxu0 0.0
    %607 = vmatpush.xpose.msra.mxu0 0.0
    %608 = vmatpush.xpose.msra.mxu0 0.0
    %609 = vmatpush.xpose.msra.mxu0 0.0
    %610 = vmatpush.xpose.msra.mxu0 0.0
    %611 = vmatpush.xpose.msra.mxu0 0.0
    %612 = vmatpush.xpose.msra.mxu0 0.0
    %613 = vmatpush.xpose.msra.mxu0 0.0
    %614 = vmatpush.xpose.msra.mxu0 0.0
    %615 = vmatpush.xpose.msra.mxu0 0.0
    %616 = vmatpush.xpose.msra.mxu0 0.0
    %617 = vmatpush.xpose.msra.mxu0 0.0
    %618 = vmatpush.xpose.msra.mxu0 0.0
    %619 = vmatpush.xpose.msra.mxu0 0.0
    %620 = vmatpush.xpose.msra.mxu0 0.0
    %621 = vmatpush.xpose.msra.mxu0 %v604
    %622 = vmatmul.f32.gmra.mxu0 %v602
    %v623 = vpop.f32.mrf.mxu0
    %v624 = vadd.f32 0.0, %v623
    %625 = vdwg.mxu0
    %626 = vrot.lane.b32.xlu0 %v94, 104
    %v627 = vpop.permute.xlu0 %626
    %628 = vrot.lane.b32.xlu0 %v131, 104
    %v629 = vpop.permute.xlu0 %628
    %v630 = vsel %vm133, %v627, 0
    %v632 = vsel %vm133, %v629, 0
    %634 = vmatpush.xpose.msra.mxu0 0.0
    %635 = vmatpush.xpose.msra.mxu0 0.0
    %636 = vmatpush.xpose.msra.mxu0 0.0
    %637 = vmatpush.xpose.msra.mxu0 0.0
    %638 = vmatpush.xpose.msra.mxu0 0.0
    %639 = vmatpush.xpose.msra.mxu0 0.0
    %640 = vmatpush.xpose.msra.mxu0 0.0
    %641 = vmatpush.xpose.msra.mxu0 0.0
    %642 = vmatpush.xpose.msra.mxu0 0.0
    %643 = vmatpush.xpose.msra.mxu0 0.0
    %644 = vmatpush.xpose.msra.mxu0 0.0
    %645 = vmatpush.xpose.msra.mxu0 0.0
    %646 = vmatpush.xpose.msra.mxu0 0.0
    %647 = vmatpush.xpose.msra.mxu0 0.0
    %648 = vmatpush.xpose.msra.mxu0 0.0
    %649 = vmatpush.xpose.msra.mxu0 %v632
    %650 = vmatmul.f32.gmra.mxu0 %v630
    %v651 = vpop.f32.mrf.mxu0
    %v652 = vadd.f32 0.0, %v651
    %653 = vdwg.mxu0
    %v654 = vsel %vm133, %v624, -inf
    %655 = vmax.xlane.f32.xlu0 %v654
    %v656 = vpop.xlane.xlu0 %655
    %v657 = vsel %vm133, %v652, -inf
    %658 = vmax.xlane.f32.xlu0 %v657
    %v659 = vpop.xlane.xlu0 %658
    %v660 = vsub.f32 %v624, %v656
    %v661 = vsub.f32 %v652, %v659
    %v662 = vmul.f32 %v660, 1.442695
    %v663 = vpow.pop %v662
    %v664 = vmul.f32 %v661, 1.442695
    %v665 = vpow.pop %v664
    %v666 = vsel %vm133, %v663, 0.0
    %667 = vadd.xlane.f32.xlu0 %v666
    %v668 = vpop.xlane.xlu0 %667
    %v669 = vsel %vm133, %v665, 0.0
    %670 = vadd.xlane.f32.xlu0 %v669
    %v671 = vpop.xlane.xlu0 %670
    %v672 = vrcp.pop %v668
    %v673 = vmul.f32 %v668, %v672
    %v674 = vsub.f32 1.0, %v673
    %v675 = vmul.f32 %v672, %v674
    %v676 = vadd.f32 %v672, %v675
    %vm677 = vweird.f32 %v668
    %vm678 = vweird.f32 %v672
    %vm679 = vmor %vm677, %vm678
    %v680 = vsel %vm679, %v672, %v676
    %v681 = vand.u32 2147483647, %v668
    %vm682 = vcmp.eq.f32.partialorder %v681, 8.507059e+37
    %v683 = vand.u32 %v668, 2147483648
    %v684 = vor.u32 1.1754944e-38, %v683
    %v685 = vsel %vm682, %v684, %v680
    %v686 = vmul.f32 %v663, %v685
    %v687 = vrcp.pop %v671
    %v688 = vmul.f32 %v671, %v687
    %v689 = vsub.f32 1.0, %v688
    %v690 = vmul.f32 %v687, %v689
    %v691 = vadd.f32 %v687, %v690
    %vm692 = vweird.f32 %v671
    %vm693 = vweird.f32 %v687
    %vm694 = vmor %vm692, %vm693
    %v695 = vsel %vm694, %v687, %v691
    %v696 = vand.u32 2147483647, %v671
    %vm697 = vcmp.eq.f32.partialorder %v696, 8.507059e+37
    %v698 = vand.u32 %v671, 2147483648
    %v699 = vor.u32 1.1754944e-38, %v698
    %v700 = vsel %vm697, %v699, %v695
    %v701 = vmul.f32 %v665, %v700
    %702 = vrot.lane.b32.xlu0 %v128, 72
    %v703 = vpop.permute.xlu0 %702
    %v706 = vsel %vm133, %v686, 0
    %708 = vmatpush.msra.mxu0 0.0
    %709 = vmatpush.msra.mxu0 0.0
    %710 = vmatpush.msra.mxu0 0.0
    %711 = vmatpush.msra.mxu0 0.0
    %712 = vmatpush.msra.mxu0 0.0
    %713 = vmatpush.msra.mxu0 0.0
    %714 = vmatpush.msra.mxu0 0.0
    %715 = vmatpush.msra.mxu0 0.0
    %716 = vmatpush.msra.mxu0 0.0
    %717 = vmatpush.msra.mxu0 0.0
    %718 = vmatpush.msra.mxu0 0.0
    %719 = vmatpush.msra.mxu0 0.0
    %720 = vmatpush.msra.mxu0 0.0
    %721 = vmatpush.msra.mxu0 0.0
    %722 = vmatpush.msra.mxu0 0.0
    %723 = vmatpush.msra.mxu0 %v703
    %724 = vmatmul.f32.gmra.mxu0 %v706
    %v725 = vpop.f32.mrf.mxu0
    %v726 = vadd.f32 0.0, %v725
    %727 = vdwg.mxu0
    %728 = vrot.lane.b32.xlu0 %v131, 72
    %v729 = vpop.permute.xlu0 %728
    %v732 = vsel %vm133, %v701, 0
    %734 = vmatpush.msra.mxu0 0.0
    %735 = vmatpush.msra.mxu0 0.0
    %736 = vmatpush.msra.mxu0 0.0
    %737 = vmatpush.msra.mxu0 0.0
    %738 = vmatpush.msra.mxu0 0.0
    %739 = vmatpush.msra.mxu0 0.0
    %740 = vmatpush.msra.mxu0 0.0
    %741 = vmatpush.msra.mxu0 0.0
    %742 = vmatpush.msra.mxu0 0.0
    %743 = vmatpush.msra.mxu0 0.0
    %744 = vmatpush.msra.mxu0 0.0
    %745 = vmatpush.msra.mxu0 0.0
    %746 = vmatpush.msra.mxu0 0.0
    %747 = vmatpush.msra.mxu0 0.0
    %748 = vmatpush.msra.mxu0 0.0
    %749 = vmatpush.msra.mxu0 %v729
    %750 = vmatmul.f32.gmra.mxu0 %v732
    %v751 = vpop.f32.mrf.mxu0
    %v752 = vadd.f32 0.0, %v751
    %753 = vdwg.mxu0
    %756 = vrot.lane.b32.xlu0 %v414, 8
    %v757 = vpop.permute.xlu0 %756
    %758 = vrot.lane.b32.xlu0 %v440, 8
    %v759 = vpop.permute.xlu0 %758
    %764 = vrot.lane.b32.xlu0 %v570, 16
    %v765 = vpop.permute.xlu0 %764
    %766 = vrot.lane.b32.xlu0 %v596, 16
    %v767 = vpop.permute.xlu0 %766
    %772 = vrot.lane.b32.xlu0 %v726, 24
    %v773 = vpop.permute.xlu0 %772
    %774 = vrot.lane.b32.xlu0 %v752, 24
    %v775 = vpop.permute.xlu0 %774
    %v778 = vsel %vm133, %v258, %v757
    %v779 = vsel %vm133, %v284, %v759
    %vm780 = vcmask 130048
    %v781 = vsel %vm780, %v778, %v765
    %v782 = vsel %vm780, %v779, %v767
    %vm783 = vcmask 195584
    %v784 = vsel %vm783, %v781, %v773
    %v785 = vsel %vm783, %v782, %v775
    %v786 = vld [vmem:[%s6] sm:$0xff]
    %v787 = vld [vmem:[%s6 + $0x8] sm:$0xff]
    %v788 = vld [vmem:[%s6 + $0x10] sm:$0xff]
    %v789 = vld [vmem:[%s6 + $0x18] sm:$0xff]
    %v790 = vld [vmem:[%s7] sm:$0x1]
    %v792 = vperm.slane %v790, 0
    %v795 = vsel %vm66, %v784, 0
    %v798 = vsel %vm66, %v785, 0
    %800 = vmatpush.msra.mxu0 0.0
    %801 = vmatpush.msra.mxu0 0.0
    %802 = vmatpush.msra.mxu0 0.0
    %803 = vmatpush.msra.mxu0 0.0
    %804 = vmatpush.msra.mxu0 0.0
    %805 = vmatpush.msra.mxu0 0.0
    %806 = vmatpush.msra.mxu0 0.0
    %807 = vmatpush.msra.mxu0 0.0
    %808 = vmatpush.msra.mxu0 0.0
    %809 = vmatpush.msra.mxu0 0.0
    %810 = vmatpush.msra.mxu0 0.0
    %811 = vmatpush.msra.mxu0 0.0
    %812 = vmatpush.msra.mxu0 %v789
    %813 = vmatpush.msra.mxu0 %v788
    %814 = vmatpush.msra.mxu0 %v787
    %815 = vmatpush.msra.mxu0 %v786
    %816 = vmatmul.f32.gmra.mxu0 %v795
    %v817 = vpop.f32.mrf.mxu0
    %v818 = vadd.f32 %v792, %v817
    %819 = vmatmul.f32.gmra.mxu0 %v798
    %v820 = vpop.f32.mrf.mxu0
    %v821 = vadd.f32 %v792, %v820
    %822 = vdwg.mxu0
    %v823 = vadd.f32 %v54, %v818
    %v824 = vadd.f32 %v55, %v821
    %v825 = vsel %vm66, %v823, 0.0
    %826 = vadd.xlane.f32.xlu0 %v825
    %v827 = vpop.xlane.xlu0 %826
    %v828 = vsel %vm66, %v824, 0.0
    %829 = vadd.xlane.f32.xlu0 %v828
    %v830 = vpop.xlane.xlu0 %829
    %v831 = vrcp.pop 32.0
    %v832 = vmul.f32 32.0, %v831
    %v833 = vsub.f32 1.0, %v832
    %v834 = vmul.f32 %v831, %v833
    %v835 = vadd.f32 %v831, %v834
    %vm836 = vweird.f32 %v831
    %v837 = vsel %vm836, %v831, %v835
    %v838 = vmul.f32 %v827, %v837
    %v839 = vmul.f32 %v830, %v837
    %v840 = vsub.f32 %v823, %v838
    %v841 = vsub.f32 %v824, %v839
    %v842 = vmul.f32 %v840, %v840
    %v843 = vmul.f32 %v841, %v841
    %v844 = vsel %vm66, %v842, 0.0
    %845 = vadd.xlane.f32.xlu0 %v844
    %v846 = vpop.xlane.xlu0 %845
    %v847 = vsel %vm66, %v843, 0.0
    %848 = vadd.xlane.f32.xlu0 %v847
    %v849 = vpop.xlane.xlu0 %848
    %v850 = vmul.f32 %v846, %v837
    %v851 = vmul.f32 %v849, %v837
    %v852 = vadd.f32 %v850, 1e-05
    %v853 = vadd.f32 %v851, 1e-05
    %v854 = vrsqrt.pop %v852
    %v855 = vmul.f32 %v854, %v852
    %v856 = vmul.f32 %v855, %v854
    %v857 = vmul.f32 0.5, %v856
    %v858 = vsub.f32 1.5, %v857
    %v859 = vmul.f32 %v854, %v858
    %vm860 = vweird.f32 %v852
    %vm861 = vweird.f32 %v854
    %vm862 = vmor %vm860, %vm861
    %v863 = vsel %vm862, %v854, %v859
    %v864 = vrsqrt.pop %v853
    %v865 = vmul.f32 %v864, %v853
    %v866 = vmul.f32 %v865, %v864
    %v867 = vmul.f32 0.5, %v866
    %v868 = vsub.f32 1.5, %v867
    %v869 = vmul.f32 %v864, %v868
    %vm870 = vweird.f32 %v853
    %vm871 = vweird.f32 %v864
    %vm872 = vmor %vm870, %vm871
    %v873 = vsel %vm872, %v864, %v869
    %v874 = vmul.f32 %v840, %v863
    %v875 = vmul.f32 %v841, %v873
    %v876 = vld [vmem:[%s8] sm:$0x1]
    %v878 = vperm.slane %v876, 0
    %v880 = vmul.f32 %v874, %v878
    %v881 = vmul.f32 %v875, %v878
    %v882 = vld [vmem:[%s9] sm:$0x1]
    %v884 = vperm.slane %v882, 0
    %v886 = vadd.f32 %v880, %v884
    %v887 = vadd.f32 %v881, %v884
    %v888 = vld [vmem:[%s10] sm:$0xff]
    %v889 = vld [vmem:[%s10 + $0x8] sm:$0xff]
    %v890 = vld [vmem:[%s10 + $0x10] sm:$0xff]
    %v891 = vld [vmem:[%s10 + $0x18] sm:$0xff]
    %v892 = vld [vmem:[%s11] sm:$0x1]
    %v894 = vperm.slane %v892, 0
    %v897 = vsel %vm66, %v886, 0
    %v900 = vsel %vm66, %v887, 0
    %902 = vmatpush.msra.mxu0 0.0
    %903 = vmatpush.msra.mxu0 0.0
    %904 = vmatpush.msra.mxu0 0.0
    %905 = vmatpush.msra.mxu0 0.0
    %906 = vmatpush.msra.mxu0 0.0
    %907 = vmatpush.msra.mxu0 0.0
    %908 = vmatpush.msra.mxu0 0.0
    %909 = vmatpush.msra.mxu0 0.0
    %910 = vmatpush.msra.mxu0 0.0
    %911 = vmatpush.msra.mxu0 0.0
    %912 = vmatpush.msra.mxu0 0.0
    %913 = vmatpush.msra.mxu0 0.0
    %914 = vmatpush.msra.mxu0 %v891
    %915 = vmatpush.msra.mxu0 %v890
    %916 = vmatpush.msra.mxu0 %v889
    %917 = vmatpush.msra.mxu0 %v888
    %918 = vmatmul.f32.gmra.mxu0 %v897
    %v919 = vpop.f32.mrf.mxu0
    %v920 = vadd.f32 %v894, %v919
    %921 = vmatmul.f32.gmra.mxu0 %v900
    %v922 = vpop.f32.mrf.mxu0
    %v923 = vadd.f32 %v894, %v922
    %924 = vdwg.mxu0
    %v925 = vmax.f32 %v920, 0.0
    %v926 = vmax.f32 %v923, 0.0
    %v927 = vld [vmem:[%s12] sm:$0xff]
    %v928 = vld [vmem:[%s12 + $0x8] sm:$0xff]
    %v929 = vld [vmem:[%s12 + $0x10] sm:$0xff]
    %v930 = vld [vmem:[%s12 + $0x18] sm:$0xff]
    %v931 = vld [vmem:[%s12 + $0x20] sm:$0xff]
    %v932 = vld [vmem:[%s12 + $0x28] sm:$0xff]
    %v933 = vld [vmem:[%s12 + $0x30] sm:$0xff]
    %v934 = vld [vmem:[%s12 + $0x38] sm:$0xff]
    %v935 = vld [vmem:[%s12 + $0x40] sm:$0xff]
    %v936 = vld [vmem:[%s12 + $0x48] sm:$0xff]
    %v937 = vld [vmem:[%s12 + $0x50] sm:$0xff]
    %v938 = vld [vmem:[%s12 + $0x58] sm:$0xff]
    %v939 = vld [vmem:[%s12 + $0x60] sm:$0xff]
    %v940 = vld [vmem:[%s12 + $0x68] sm:$0xff]
    %v941 = vld [vmem:[%s12 + $0x70] sm:$0xff]
    %v942 = vld [vmem:[%s12 + $0x78] sm:$0xff]
    %v943 = vld [vmem:[%s13] sm:$0x1]
    %v945 = vperm.slane %v943, 0
    %947 = vmatpush.msra.mxu0 %v942
    %948 = vmatpush.msra.mxu0 %v941
    %949 = vmatpush.msra.mxu0 %v940
    %950 = vmatpush.msra.mxu0 %v939
    %951 = vmatpush.msra.mxu0 %v938
    %952 = vmatpush.msra.mxu0 %v937
    %953 = vmatpush.msra.mxu0 %v936
    %954 = vmatpush.msra.mxu0 %v935
    %955 = vmatpush.msra.mxu0 %v934
    %956 = vmatpush.msra.mxu0 %v933
    %957 = vmatpush.msra.mxu0 %v932
    %958 = vmatpush.msra.mxu0 %v931
    %959 = vmatpush.msra.mxu0 %v930
    %960 = vmatpush.msra.mxu0 %v929
    %961 = vmatpush.msra.mxu0 %v928
    %962 = vmatpush.msra.mxu0 %v927
    %963 = vmatmul.f32.gmra.mxu0 %v925
    %v964 = vpop.f32.mrf.mxu0
    %v965 = vadd.f32 %v945, %v964
    %966 = vmatmul.f32.gmra.mxu0 %v926
    %v967 = vpop.f32.mrf.mxu0
    %v968 = vadd.f32 %v945, %v967
    %969 = vdwg.mxu0
    %v970 = vadd.f32 %v886, %v965
    %v971 = vadd.f32 %v887, %v968
    %v972 = vsel %vm66, %v970, 0.0
    %973 = vadd.xlane.f32.xlu0 %v972
    %v974 = vpop.xlane.xlu0 %973
    %v975 = vsel %vm66, %v971, 0.0
    %976 = vadd.xlane.f32.xlu0 %v975
    %v977 = vpop.xlane.xlu0 %976
    %v978 = vmul.f32 %v974, %v837
    %v979 = vmul.f32 %v977, %v837
    %v980 = vsub.f32 %v970, %v978
    %v981 = vsub.f32 %v971, %v979
    %v982 = vmul.f32 %v980, %v980
    %v983 = vmul.f32 %v981, %v981
    %v984 = vsel %vm66, %v982, 0.0
    %985 = vadd.xlane.f32.xlu0 %v984
    %v986 = vpop.xlane.xlu0 %985
    %v987 = vsel %vm66, %v983, 0.0
    %988 = vadd.xlane.f32.xlu0 %v987
    %v989 = vpop.xlane.xlu0 %988
    %v990 = vmul.f32 %v986, %v837
    %v991 = vmul.f32 %v989, %v837
    %v992 = vadd.f32 %v990, 1e-05
    %v993 = vadd.f32 %v991, 1e-05
    %v994 = vrsqrt.pop %v992
    %v995 = vmul.f32 %v994, %v992
    %v996 = vmul.f32 %v995, %v994
    %v997 = vmul.f32 0.5, %v996
    %v998 = vsub.f32 1.5, %v997
    %v999 = vmul.f32 %v994, %v998
    %vm1000 = vweird.f32 %v992
    %vm1001 = vweird.f32 %v994
    %vm1002 = vmor %vm1000, %vm1001
    %v1003 = vsel %vm1002, %v994, %v999
    %v1004 = vrsqrt.pop %v993
    %v1005 = vmul.f32 %v1004, %v993
    %v1006 = vmul.f32 %v1005, %v1004
    %v1007 = vmul.f32 0.5, %v1006
    %v1008 = vsub.f32 1.5, %v1007
    %v1009 = vmul.f32 %v1004, %v1008
    %vm1010 = vweird.f32 %v993
    %vm1011 = vweird.f32 %v1004
    %vm1012 = vmor %vm1010, %vm1011
    %v1013 = vsel %vm1012, %v1004, %v1009
    %v1014 = vmul.f32 %v980, %v1003
    %v1015 = vmul.f32 %v981, %v1013
    %v1016 = vld [vmem:[%s14] sm:$0x1]
    %v1018 = vperm.slane %v1016, 0
    %v1020 = vmul.f32 %v1014, %v1018
    %v1021 = vmul.f32 %v1015, %v1018
    %v1022 = vld [vmem:[%s15] sm:$0x1]
    %v1024 = vperm.slane %v1022, 0
    %v1026 = vadd.f32 %v1020, %v1024
    %v1027 = vadd.f32 %v1021, %v1024
    %1028 = vst.msk [vmem:[#allocation2] sm:$0xff] %vm66, %v1026
    %1029 = vst.msk [vmem:[#allocation2 + $0x8] sm:$0xff] %vm66, %v1027
    // Predicated region
    $region66: #{tpu_custom_call.1} parent=1 // pred_check
      _
    $region67: #{tpu_custom_call.1} parent=1 // pred_check_branch
      %1031 = sbr.rel (0) target = $region69
    $region68: #{tpu_custom_call.1} parent=1 // pred_region
      %1033 = vsyncadd [#allocation3], 0
      %s1034 = sshll.u32 [#allocation2], 4
      %s1035 = int_to_ptr.vmem [resolvable:$true] %s1034
      %s1036 = sshll.u32 %s16, 4
      %s1037 = int_to_ptr.hbm [resolvable:$true] %s1036
      %1042 = dma.vmem_to_hbm [thread:$0]  %s1035, 256, %s1037, [#allocation3], 128, 128, 8
    $region69: #{tpu_custom_call.1} parent=1 // pred_fallthru
      _
    // Predicated region
    $region70: #{tpu_custom_call.1} parent=1 // pred_check
      _
    $region71: #{tpu_custom_call.1} parent=1 // pred_check_branch
      %1044 = sbr.rel (0) target = $region73
    $region72: #{tpu_custom_call.1} parent=1 // pred_region
      %1046 = dma.done [#allocation3], 256
    $region73: #{tpu_custom_call.1} parent=1 // pred_fallthru
      _
    %1047 = vsyncpa [#allocation3], 1

</llo_original>
